<compile_context>
chip_gen: v5e
topology: v5e:2x2
jax: 0.10.0
libtpu: 0.0.40
codegen_flags: <defaults>
</compile_context>

<pallas_src>
import jax
import jax.numpy as jnp
from jax.experimental import pallas as pl
from jax.experimental.pallas import tpu as pltpu

NH = 128  # lane-dense pad width for every narrow feature axis


# ---------------------------------------------------------------------------
# The fused kernel
# ---------------------------------------------------------------------------
def _lenet_kernel(x_ref, a1_ref, cb1_ref, a2_ref, cb2_ref,
                  w1_ref, fb1_ref, w2_ref, fb2_ref, w3_ref, fb3_ref,
                  out_ref):
    f32 = jnp.float32
    h1, bb, k1 = x_ref.shape            # (24, BB, kh*W*Cin)
    nh = cb1_ref.shape[-1]              # 128
    kh = a2_ref.shape[0] // nh          # 5
    p1 = h1 // 2                        # 12
    h2 = p1 - kh + 1                    # 8
    p2 = h2 // 2                        # 4
    cdt = a1_ref.dtype                  # MXU operand dtype (bf16)

    # ---- conv1 (+bias, ReLU, 2x2 max-pool): one MXU dot -------------------
    # K already carries the kh row-shifted taps (unfolded in the wrapper);
    # the weight's two 128-lane output halves are the even / odd pooled
    # columns, so the W-pool is a VPU max of vreg-aligned halves.
    rows = x_ref[...].reshape(h1 * bb, k1)
    z = jnp.dot(rows, a1_ref[...], preferred_element_type=f32)    # (h1*bb, 2*nh)
    m = jnp.maximum(z[:, :nh], z[:, nh:])                         # pool over W
    m = m.reshape(p1, 2, bb, nh)
    v = jnp.maximum(m[:, 0], m[:, 1])                             # pool over H
    v = jnp.maximum(v + cb1_ref[...], 0.0)                        # (p1, bb, nh) f32

    # ---- conv2 (+bias, ReLU, 2x2 max-pool): in-kernel H-unfold + one dot --
    vq = v.astype(cdt)
    rows = jnp.concatenate([vq[di:di + h2] for di in range(kh)], axis=-1)
    rows = rows.reshape(h2 * bb, kh * nh)                         # K = kh*128
    z = jnp.dot(rows, a2_ref[...], preferred_element_type=f32)    # (h2*bb, 2*nh)
    m = jnp.maximum(z[:, :nh], z[:, nh:])
    m = m.reshape(p2, 2, bb, nh)
    u = jnp.maximum(m[:, 0], m[:, 1])
    u = jnp.maximum(u + cb2_ref[...], 0.0)                        # (p2, bb, nh) f32

    # ---- fc1 / fc2 / fc3 (all dims zero-padded to 128 lanes) --------------
    uq = u.astype(cdt)
    flat = jnp.concatenate([uq[hh] for hh in range(p2)], axis=-1)  # (bb, p2*nh)
    y = jnp.dot(flat, w1_ref[...], preferred_element_type=f32) + fb1_ref[...]
    y = jnp.maximum(y, 0.0)
    y = jnp.dot(y.astype(cdt), w2_ref[...], preferred_element_type=f32) + fb2_ref[...]
    y = jnp.maximum(y, 0.0)
    y = jnp.dot(y.astype(cdt), w3_ref[...], preferred_element_type=f32) + fb3_ref[...]
    out_ref[...] = y.astype(out_ref.dtype)


# ---------------------------------------------------------------------------
# Weight preparation (done once, outside the hot path)
# ---------------------------------------------------------------------------
def _conv_pool_mats(w, w_in):
    # w: PyTorch conv weight (Cout, Cin, KH, KW).  Returns (even, odd) banded
    # matrices of shape (KH, w_in*Cin, (w_conv//2)*Cout) mapping one input row
    # (lanes = x_in*Cin + ci) to conv outputs at even / odd columns, i.e. with
    # the stride-2 W sub-sampling of the 2x2 max-pool already folded in.
    cout, cin, kh, kw = w.shape
    w_conv = w_in - kw + 1
    assert w_conv % 2 == 0
    wh = w_conv // 2
    wt = jnp.transpose(w, (2, 3, 1, 0)).astype(jnp.float32)   # (kh, kw, cin, cout)
    xin = jnp.arange(w_in)

    def band(col_start):                        # col_start: (wh,) first tap column
        d = xin[:, None] - col_start[None, :]   # (w_in, wh)
        valid = (d >= 0) & (d < kw)
        g = wt[:, jnp.clip(d, 0, kw - 1)]       # (kh, w_in, wh, cin, cout)
        g = jnp.where(valid[None, :, :, None, None], g, 0.0)
        g = jnp.transpose(g, (0, 1, 3, 2, 4))   # (kh, w_in, cin, wh, cout)
        return g.reshape(kh, w_in * cin, wh * cout)

    x2 = jnp.arange(wh)
    return band(2 * x2), band(2 * x2 + 1)


def _pad_axis(a, axis, size):
    pad = [(0, 0)] * a.ndim
    pad[axis] = (0, size - a.shape[axis])
    return jnp.pad(a, pad)


def prepare_params(params, h_in=28, w_in=28, compute_dtype=jnp.bfloat16):
    kh = params["conv1_w"].shape[2]
    cin = params["conv1_w"].shape[1]
    c1 = params["conv1_w"].shape[0]
    c2 = params["conv2_w"].shape[0]
    h1, w1c = h_in - kh + 1, w_in - kh + 1
    p1h, p1w = h1 // 2, w1c // 2
    h2, w2c = p1h - kh + 1, p1w - kh + 1
    p2h, p2w = h2 // 2, w2c // 2
    wc = w_in * cin
    n1 = p1w * c1                               # 72
    n2 = p2w * c2                               # 64
    assert n1 <= NH and n2 <= NH

    a1e, a1o = _conv_pool_mats(params["conv1_w"], w_in)   # (kh, wc, n1)
    a2e, a2o = _conv_pool_mats(params["conv2_w"], p1w)    # (kh, n1, n2)

    def merge_even_odd(ae, ao):
        k = ae.shape[0] * ae.shape[1]
        ae = _pad_axis(ae.reshape(k, -1), 1, NH)
        ao = _pad_axis(ao.reshape(k, -1), 1, NH)
        return jnp.concatenate([ae, ao], axis=1)          # (k, 2*NH)

    # conv1: kh taps fused along K (rows = di*wc + lane), even/odd along N.
    a1 = merge_even_odd(a1e, a1o)                                      # (kh*wc, 256)
    # conv2: its LHS rows are kh concatenated 128-lane slabs of the padded
    # conv1 output, so pad per-tap input lanes n1 -> 128 before merging.
    a2 = merge_even_odd(_pad_axis(a2e, 1, NH), _pad_axis(a2o, 1, NH))  # (kh*128, 256)

    cb1 = _pad_axis(jnp.tile(params["conv1_b"], p1w).reshape(1, n1), 1, NH)
    cb2 = _pad_axis(jnp.tile(params["conv2_b"], p2w).reshape(1, n2), 1, NH)

    nf1 = params["fc1_w"].shape[0]
    assert params["fc1_w"].shape[1] == c2 * p2h * p2w, "fc1 expects 28x28 input"
    # Fold the PyTorch flatten order (c, h, w) into fc1 and lay it out as one
    # (p2h*128, 128) slab matching the kernel's lane-concatenated activations.
    w1 = params["fc1_w"].reshape(nf1, c2, p2h, p2w)
    w1 = jnp.transpose(w1, (2, 3, 1, 0)).reshape(p2h, n2, nf1)
    w1 = _pad_axis(_pad_axis(w1, 1, NH), 2, NH).reshape(p2h * NH, NH)
    w2 = _pad_axis(_pad_axis(params["fc2_w"].T, 0, NH), 1, NH)
    w3 = _pad_axis(_pad_axis(params["fc3_w"].T, 0, NH), 1, NH)
    fb1 = _pad_axis(params["fc1_b"].reshape(1, -1), 1, NH)
    fb2 = _pad_axis(params["fc2_b"].reshape(1, -1), 1, NH)
    fb3 = _pad_axis(params["fc3_b"].reshape(1, -1), 1, NH)

    cdt, f32 = compute_dtype, jnp.float32
    return dict(
        a1=a1.astype(cdt), cb1=cb1.astype(f32),
        a2=a2.astype(cdt), cb2=cb2.astype(f32),
        w1=w1.astype(cdt), fb1=fb1.astype(f32),
        w2=w2.astype(cdt), fb2=fb2.astype(f32),
        w3=w3.astype(cdt), fb3=fb3.astype(f32),
    )


# ---------------------------------------------------------------------------
# Forward pass (one pallas_call)
# ---------------------------------------------------------------------------
def _pick_block_batch(B):
    # Batch rows per grid step: large enough to fill the MXU M dim and
    # amortize per-step overhead, a multiple of 8, capped at 256 (working set
    # stays ~10 MB even at 256), and chosen so the grid has >= 2 steps when
    # the batch allows it (v7x has 2 TensorCores; batch axis is "parallel").
    bb = -(-B // 2)
    bb = -(-bb // 8) * 8
    return max(8, min(256, bb))


def forward(prep, x_nchw, *, num_classes=10):
    B, cin, H, W = x_nchw.shape
    a1 = prep["a1"]
    cdt = a1.dtype
    wc = W * cin
    kh = a1.shape[0] // wc
    nh = a1.shape[1] // 2               # 128
    h1 = H - kh + 1
    p1 = h1 // 2
    h2 = p1 - kh + 1
    p2 = h2 // 2

    # NCHW -> (H, B, W*Cin), then unfold the kh conv1 taps along lanes so the
    # kernel's conv1 is a single K = kh*W*Cin matmul.
    xt = jnp.transpose(x_nchw, (2, 0, 3, 1)).reshape(H, B, wc).astype(cdt)
    x_unf = jnp.concatenate([xt[di:di + h1] for di in range(kh)], axis=-1)

    BB = _pick_block_batch(B)
    G = pl.cdiv(B, BB)
    pad = G * BB - B
    if pad:
        x_unf = jnp.pad(x_unf, ((0, 0), (0, pad), (0, 0)))

    weights = (prep["a1"], prep["cb1"], prep["a2"], prep["cb2"],
               prep["w1"], prep["fb1"], prep["w2"], prep["fb2"],
               prep["w3"], prep["fb3"])

    def full(a):
        nd = a.ndim
        return pl.BlockSpec(a.shape, lambda g, _n=nd: (0,) * _n)

    flops = 2 * G * BB * (h1 * (kh * wc) * (2 * nh)
                          + h2 * (kh * nh) * (2 * nh)
                          + (p2 * nh) * nh + nh * nh + nh * nh)
    bytes_acc = (x_unf.size * x_unf.dtype.itemsize
                 + sum(w.size * w.dtype.itemsize for w in weights)
                 + G * BB * nh * 4)

    out = pl.pallas_call(
        _lenet_kernel,
        out_shape=jax.ShapeDtypeStruct((G * BB, nh), jnp.float32),
        grid=(G,),
        in_specs=[pl.BlockSpec((h1, BB, kh * wc), lambda g: (0, g, 0))]
                 + [full(w) for w in weights],
        out_specs=pl.BlockSpec((BB, nh), lambda g: (g, 0)),
        compiler_params=pltpu.CompilerParams(
            dimension_semantics=("parallel",),
            vmem_limit_bytes=32 * 1024 * 1024),
        cost_estimate=pl.CostEstimate(
            flops=int(flops), transcendentals=0,
            bytes_accessed=int(bytes_acc)),
    )(x_unf, *weights)
    return out[:B, :num_classes]


# ---------------------------------------------------------------------------
# Pure-JAX reference (for correctness check) and param init
# ---------------------------------------------------------------------------
def reference(params, x_nchw):
    def conv(x, w, b):
        y = jax.lax.conv_general_dilated(
            x, w, (1, 1), "VALID", dimension_numbers=("NCHW", "OIHW", "NCHW"))
        return y + b[None, :, None, None]

    def pool(x):
        return jax.lax.reduce_window(
            x, -jnp.inf, jax.lax.max, (1, 1, 2, 2), (1, 1, 2, 2), "VALID")

    x = x_nchw.astype(jnp.float32)
    y = pool(jnp.maximum(conv(x, params["conv1_w"], params["conv1_b"]), 0.0))
    y = pool(jnp.maximum(conv(y, params["conv2_w"], params["conv2_b"]), 0.0))
    y = y.reshape(y.shape[0], -1)
    y = jnp.maximum(y @ params["fc1_w"].T + params["fc1_b"], 0.0)
    y = jnp.maximum(y @ params["fc2_w"].T + params["fc2_b"], 0.0)
    y = y @ params["fc3_w"].T + params["fc3_b"]
    return y


def init_params(key, input_channels=1, num_classes=10):
    ks = jax.random.split(key, 10)
    s = 0.1
    return {
        "conv1_w": s * jax.random.normal(ks[0], (6, input_channels, 5, 5), jnp.float32),
        "conv1_b": s * jax.random.normal(ks[1], (6,), jnp.float32),
        "conv2_w": s * jax.random.normal(ks[2], (16, 6, 5, 5), jnp.float32),
        "conv2_b": s * jax.random.normal(ks[3], (16,), jnp.float32),
        "fc1_w": s * jax.random.normal(ks[4], (120, 16 * 4 * 4), jnp.float32),
        "fc1_b": s * jax.random.normal(ks[5], (120,), jnp.float32),
        "fc2_w": s * jax.random.normal(ks[6], (84, 120), jnp.float32),
        "fc2_b": s * jax.random.normal(ks[7], (84,), jnp.float32),
        "fc3_w": s * jax.random.normal(ks[8], (10, 84), jnp.float32),
        "fc3_b": s * jax.random.normal(ks[9], (10,), jnp.float32),
    }


if __name__ == "__main__":
    key = jax.random.PRNGKey(0)
    k_param, k_x = jax.random.split(key)
    k_x1, k_x2 = jax.random.split(k_x)
    params = init_params(k_param)

    # bf16 MXU operands (f32 accumulation / elementwise) -> loosened tolerance.
    prep = jax.tree_util.tree_map(jax.block_until_ready,
                                  prepare_params(params, 28, 28))
    fwd = jax.jit(forward)
    TOL = dict(rtol=5e-2, atol=5e-2)

    # MNIST-shaped input (28x28 required by fc1's 16*4*4 = 256 input dim).
    x = jax.random.normal(k_x1, (2, 1, 28, 28), jnp.float32)
    out = jax.block_until_ready(fwd(prep, x))
    assert out.shape == (2, 10), out.shape
    ref = jax.block_until_ready(reference(params, x))
    assert jnp.allclose(out, ref, **TOL), "Pallas output mismatch vs reference"

    # Second check exercising a multi-step grid (G=2) plus batch padding.
    x2 = jax.random.normal(k_x2, (24, 1, 28, 28), jnp.float32)
    out2 = jax.block_until_ready(fwd(prep, x2))
    assert out2.shape == (24, 10), out2.shape
    ref2 = jax.block_until_ready(reference(params, x2))
    assert jnp.allclose(out2, ref2, **TOL), "Pallas output mismatch (multi-step grid)"

    print("KERNEL_OK")
</pallas_src>

<mosaic_0001>
module attributes {stable_mosaic.version = 11 : i64} {
  func.func @_lenet_kernel(%arg0: i32, %arg1: memref<24x8x140xbf16, #tpu.memory_space<vmem>>, %arg2: memref<140x256xbf16, #tpu.memory_space<vmem>>, %arg3: memref<1x128xf32, #tpu.memory_space<vmem>>, %arg4: memref<640x256xbf16, #tpu.memory_space<vmem>>, %arg5: memref<1x128xf32, #tpu.memory_space<vmem>>, %arg6: memref<512x128xbf16, #tpu.memory_space<vmem>>, %arg7: memref<1x128xf32, #tpu.memory_space<vmem>>, %arg8: memref<128x128xbf16, #tpu.memory_space<vmem>>, %arg9: memref<1x128xf32, #tpu.memory_space<vmem>>, %arg10: memref<128x128xbf16, #tpu.memory_space<vmem>>, %arg11: memref<1x128xf32, #tpu.memory_space<vmem>>, %arg12: memref<8x128xf32, #tpu.memory_space<vmem>>) attributes {dimension_semantics = [#tpu.dimension_semantics<parallel>], iteration_bounds = array<i64: 1>, scalar_prefetch = 0 : i64, scratch_operands = 0 : i64, tpu.core_type = #tpu.core_type<tc>, window_params = [{transform_indices = @transform_0, window_bounds = array<i64: 24, 8, 140>}, {pipeline_mode = #tpu.pipeline_mode<synchronous>, transform_indices = @transform_1, window_bounds = array<i64: 140, 256>}, {pipeline_mode = #tpu.pipeline_mode<synchronous>, transform_indices = @transform_2, window_bounds = array<i64: 1, 128>}, {pipeline_mode = #tpu.pipeline_mode<synchronous>, transform_indices = @transform_3, window_bounds = array<i64: 640, 256>}, {pipeline_mode = #tpu.pipeline_mode<synchronous>, transform_indices = @transform_4, window_bounds = array<i64: 1, 128>}, {pipeline_mode = #tpu.pipeline_mode<synchronous>, transform_indices = @transform_5, window_bounds = array<i64: 512, 128>}, {pipeline_mode = #tpu.pipeline_mode<synchronous>, transform_indices = @transform_6, window_bounds = array<i64: 1, 128>}, {pipeline_mode = #tpu.pipeline_mode<synchronous>, transform_indices = @transform_7, window_bounds = array<i64: 128, 128>}, {pipeline_mode = #tpu.pipeline_mode<synchronous>, transform_indices = @transform_8, window_bounds = array<i64: 1, 128>}, {pipeline_mode = #tpu.pipeline_mode<synchronous>, transform_indices = @transform_9, window_bounds = array<i64: 128, 128>}, {pipeline_mode = #tpu.pipeline_mode<synchronous>, transform_indices = @transform_10, window_bounds = array<i64: 1, 128>}, {transform_indices = @transform_11, window_bounds = array<i64: 8, 128>}]} {
    %c0 = arith.constant 0 : index
    %c0_0 = arith.constant 0 : index
    %c0_1 = arith.constant 0 : index
    %0 = vector.load %arg1[%c0, %c0_0, %c0_1] : memref<24x8x140xbf16, #tpu.memory_space<vmem>>, vector<24x8x140xbf16>
    %1 = vector.shape_cast %0 : vector<24x8x140xbf16> to vector<192x140xbf16>
    %c0_2 = arith.constant 0 : index
    %c0_3 = arith.constant 0 : index
    %2 = vector.load %arg2[%c0_2, %c0_3] : memref<140x256xbf16, #tpu.memory_space<vmem>>, vector<140x256xbf16>
    %cst = arith.constant dense<0.000000e+00> : vector<192x256xf32>
    %3 = tpu.matmul %1, %2, %cst {dimension_numbers = #tpu.dot_dimension_numbers<[1], [0], [0], [1], [0, 0, 1, 1], [], []>} : vector<192x140xbf16>, vector<140x256xbf16>, vector<192x256xf32> -> vector<192x256xf32>
    %4 = vector.extract_strided_slice %3 {offsets = [0, 0], sizes = [192, 128], strides = [1, 1]} : vector<192x256xf32> to vector<192x128xf32>
    %5 = vector.extract_strided_slice %3 {offsets = [0, 128], sizes = [192, 128], strides = [1, 1]} : vector<192x256xf32> to vector<192x128xf32>
    %6 = arith.maximumf %4, %5 : vector<192x128xf32>
    %7 = vector.shape_cast %6 : vector<192x128xf32> to vector<12x2x8x128xf32>
    %8 = vector.extract_strided_slice %7 {offsets = [0, 0, 0, 0], sizes = [12, 1, 8, 128], strides = [1, 1, 1, 1]} : vector<12x2x8x128xf32> to vector<12x1x8x128xf32>
    %9 = vector.shape_cast %8 : vector<12x1x8x128xf32> to vector<12x8x128xf32>
    %10 = vector.extract_strided_slice %7 {offsets = [0, 1, 0, 0], sizes = [12, 1, 8, 128], strides = [1, 1, 1, 1]} : vector<12x2x8x128xf32> to vector<12x1x8x128xf32>
    %11 = vector.shape_cast %10 : vector<12x1x8x128xf32> to vector<12x8x128xf32>
    %12 = arith.maximumf %9, %11 : vector<12x8x128xf32>
    %c0_4 = arith.constant 0 : index
    %c0_5 = arith.constant 0 : index
    %13 = vector.load %arg3[%c0_4, %c0_5] : memref<1x128xf32, #tpu.memory_space<vmem>>, vector<1x128xf32>
    %14 = vector.shape_cast %13 : vector<1x128xf32> to vector<1x1x128xf32>
    %15 = vector.broadcast %14 : vector<1x1x128xf32> to vector<12x8x128xf32>
    %16 = arith.addf %12, %15 : vector<12x8x128xf32>
    %cst_6 = arith.constant 0.000000e+00 : f32
    %17 = vector.broadcast %cst_6 : f32 to vector<12x8x128xf32>
    %18 = arith.maximumf %16, %17 : vector<12x8x128xf32>
    %19 = arith.truncf %18 : vector<12x8x128xf32> to vector<12x8x128xbf16>
    %20 = vector.extract_strided_slice %19 {offsets = [0, 0, 0], sizes = [8, 8, 128], strides = [1, 1, 1]} : vector<12x8x128xbf16> to vector<8x8x128xbf16>
    %21 = vector.extract_strided_slice %19 {offsets = [1, 0, 0], sizes = [8, 8, 128], strides = [1, 1, 1]} : vector<12x8x128xbf16> to vector<8x8x128xbf16>
    %22 = vector.extract_strided_slice %19 {offsets = [2, 0, 0], sizes = [8, 8, 128], strides = [1, 1, 1]} : vector<12x8x128xbf16> to vector<8x8x128xbf16>
    %23 = vector.extract_strided_slice %19 {offsets = [3, 0, 0], sizes = [8, 8, 128], strides = [1, 1, 1]} : vector<12x8x128xbf16> to vector<8x8x128xbf16>
    %24 = vector.extract_strided_slice %19 {offsets = [4, 0, 0], sizes = [8, 8, 128], strides = [1, 1, 1]} : vector<12x8x128xbf16> to vector<8x8x128xbf16>
    %25 = tpu.concatenate %20, %21, %22, %23, %24 in 2 : vector<8x8x128xbf16>, vector<8x8x128xbf16>, vector<8x8x128xbf16>, vector<8x8x128xbf16>, vector<8x8x128xbf16> -> vector<8x8x640xbf16>
    %26 = vector.shape_cast %25 : vector<8x8x640xbf16> to vector<64x640xbf16>
    %c0_7 = arith.constant 0 : index
    %c0_8 = arith.constant 0 : index
    %27 = vector.load %arg4[%c0_7, %c0_8] : memref<640x256xbf16, #tpu.memory_space<vmem>>, vector<640x256xbf16>
    %cst_9 = arith.constant dense<0.000000e+00> : vector<64x256xf32>
    %28 = tpu.matmul %26, %27, %cst_9 {dimension_numbers = #tpu.dot_dimension_numbers<[1], [0], [0], [1], [0, 0, 1, 1], [], []>} : vector<64x640xbf16>, vector<640x256xbf16>, vector<64x256xf32> -> vector<64x256xf32>
    %29 = vector.extract_strided_slice %28 {offsets = [0, 0], sizes = [64, 128], strides = [1, 1]} : vector<64x256xf32> to vector<64x128xf32>
    %30 = vector.extract_strided_slice %28 {offsets = [0, 128], sizes = [64, 128], strides = [1, 1]} : vector<64x256xf32> to vector<64x128xf32>
    %31 = arith.maximumf %29, %30 : vector<64x128xf32>
    %32 = vector.shape_cast %31 : vector<64x128xf32> to vector<4x2x8x128xf32>
    %33 = vector.extract_strided_slice %32 {offsets = [0, 0, 0, 0], sizes = [4, 1, 8, 128], strides = [1, 1, 1, 1]} : vector<4x2x8x128xf32> to vector<4x1x8x128xf32>
    %34 = vector.shape_cast %33 : vector<4x1x8x128xf32> to vector<4x8x128xf32>
    %35 = vector.extract_strided_slice %32 {offsets = [0, 1, 0, 0], sizes = [4, 1, 8, 128], strides = [1, 1, 1, 1]} : vector<4x2x8x128xf32> to vector<4x1x8x128xf32>
    %36 = vector.shape_cast %35 : vector<4x1x8x128xf32> to vector<4x8x128xf32>
    %37 = arith.maximumf %34, %36 : vector<4x8x128xf32>
    %c0_10 = arith.constant 0 : index
    %c0_11 = arith.constant 0 : index
    %38 = vector.load %arg5[%c0_10, %c0_11] : memref<1x128xf32, #tpu.memory_space<vmem>>, vector<1x128xf32>
    %39 = vector.shape_cast %38 : vector<1x128xf32> to vector<1x1x128xf32>
    %40 = vector.broadcast %39 : vector<1x1x128xf32> to vector<4x8x128xf32>
    %41 = arith.addf %37, %40 : vector<4x8x128xf32>
    %cst_12 = arith.constant 0.000000e+00 : f32
    %42 = vector.broadcast %cst_12 : f32 to vector<4x8x128xf32>
    %43 = arith.maximumf %41, %42 : vector<4x8x128xf32>
    %44 = arith.truncf %43 : vector<4x8x128xf32> to vector<4x8x128xbf16>
    %45 = vector.extract_strided_slice %44 {offsets = [0, 0, 0], sizes = [1, 8, 128], strides = [1, 1, 1]} : vector<4x8x128xbf16> to vector<1x8x128xbf16>
    %46 = vector.shape_cast %45 : vector<1x8x128xbf16> to vector<8x128xbf16>
    %47 = vector.extract_strided_slice %44 {offsets = [1, 0, 0], sizes = [1, 8, 128], strides = [1, 1, 1]} : vector<4x8x128xbf16> to vector<1x8x128xbf16>
    %48 = vector.shape_cast %47 : vector<1x8x128xbf16> to vector<8x128xbf16>
    %49 = vector.extract_strided_slice %44 {offsets = [2, 0, 0], sizes = [1, 8, 128], strides = [1, 1, 1]} : vector<4x8x128xbf16> to vector<1x8x128xbf16>
    %50 = vector.shape_cast %49 : vector<1x8x128xbf16> to vector<8x128xbf16>
    %51 = vector.extract_strided_slice %44 {offsets = [3, 0, 0], sizes = [1, 8, 128], strides = [1, 1, 1]} : vector<4x8x128xbf16> to vector<1x8x128xbf16>
    %52 = vector.shape_cast %51 : vector<1x8x128xbf16> to vector<8x128xbf16>
    %53 = tpu.concatenate %46, %48, %50, %52 in 1 : vector<8x128xbf16>, vector<8x128xbf16>, vector<8x128xbf16>, vector<8x128xbf16> -> vector<8x512xbf16>
    %c0_13 = arith.constant 0 : index
    %c0_14 = arith.constant 0 : index
    %54 = vector.load %arg6[%c0_13, %c0_14] : memref<512x128xbf16, #tpu.memory_space<vmem>>, vector<512x128xbf16>
    %cst_15 = arith.constant dense<0.000000e+00> : vector<8x128xf32>
    %55 = tpu.matmul %53, %54, %cst_15 {dimension_numbers = #tpu.dot_dimension_numbers<[1], [0], [0], [1], [0, 0, 1, 1], [], []>} : vector<8x512xbf16>, vector<512x128xbf16>, vector<8x128xf32> -> vector<8x128xf32>
    %c0_16 = arith.constant 0 : index
    %c0_17 = arith.constant 0 : index
    %56 = vector.load %arg7[%c0_16, %c0_17] : memref<1x128xf32, #tpu.memory_space<vmem>>, vector<1x128xf32>
    %57 = vector.broadcast %56 : vector<1x128xf32> to vector<8x128xf32>
    %58 = arith.addf %55, %57 : vector<8x128xf32>
    %cst_18 = arith.constant 0.000000e+00 : f32
    %59 = vector.broadcast %cst_18 : f32 to vector<8x128xf32>
    %60 = arith.maximumf %58, %59 : vector<8x128xf32>
    %61 = arith.truncf %60 : vector<8x128xf32> to vector<8x128xbf16>
    %c0_19 = arith.constant 0 : index
    %c0_20 = arith.constant 0 : index
    %62 = vector.load %arg8[%c0_19, %c0_20] : memref<128x128xbf16, #tpu.memory_space<vmem>>, vector<128x128xbf16>
    %cst_21 = arith.constant dense<0.000000e+00> : vector<8x128xf32>
    %63 = tpu.matmul %61, %62, %cst_21 {dimension_numbers = #tpu.dot_dimension_numbers<[1], [0], [0], [1], [0, 0, 1, 1], [], []>} : vector<8x128xbf16>, vector<128x128xbf16>, vector<8x128xf32> -> vector<8x128xf32>
    %c0_22 = arith.constant 0 : index
    %c0_23 = arith.constant 0 : index
    %64 = vector.load %arg9[%c0_22, %c0_23] : memref<1x128xf32, #tpu.memory_space<vmem>>, vector<1x128xf32>
    %65 = vector.broadcast %64 : vector<1x128xf32> to vector<8x128xf32>
    %66 = arith.addf %63, %65 : vector<8x128xf32>
    %cst_24 = arith.constant 0.000000e+00 : f32
    %67 = vector.broadcast %cst_24 : f32 to vector<8x128xf32>
    %68 = arith.maximumf %66, %67 : vector<8x128xf32>
    %69 = arith.truncf %68 : vector<8x128xf32> to vector<8x128xbf16>
    %c0_25 = arith.constant 0 : index
    %c0_26 = arith.constant 0 : index
    %70 = vector.load %arg10[%c0_25, %c0_26] : memref<128x128xbf16, #tpu.memory_space<vmem>>, vector<128x128xbf16>
    %cst_27 = arith.constant dense<0.000000e+00> : vector<8x128xf32>
    %71 = tpu.matmul %69, %70, %cst_27 {dimension_numbers = #tpu.dot_dimension_numbers<[1], [0], [0], [1], [0, 0, 1, 1], [], []>} : vector<8x128xbf16>, vector<128x128xbf16>, vector<8x128xf32> -> vector<8x128xf32>
    %c0_28 = arith.constant 0 : index
    %c0_29 = arith.constant 0 : index
    %72 = vector.load %arg11[%c0_28, %c0_29] : memref<1x128xf32, #tpu.memory_space<vmem>>, vector<1x128xf32>
    %73 = vector.broadcast %72 : vector<1x128xf32> to vector<8x128xf32>
    %74 = arith.addf %71, %73 : vector<8x128xf32>
    %c0_30 = arith.constant 0 : index
    %c0_31 = arith.constant 0 : index
    %75 = vector.load %arg12[%c0_30, %c0_31] : memref<8x128xf32, #tpu.memory_space<vmem>>, vector<8x128xf32>
    tpu.vector_store %arg12[%c0_30, %c0_31], %74 {strides = array<i32>} : memref<8x128xf32, #tpu.memory_space<vmem>>, vector<8x128xf32>,
    return
  }
  func.func @transform_0(%arg0: i32) -> (i32, i32, i32) {
    %c0_i32 = arith.constant 0 : i32
    %c0_i32_0 = arith.constant 0 : i32
    %c0_i32_1 = arith.constant 0 : i32
    return %c0_i32, %arg0, %c0_i32_0 : i32, i32, i32
  }
  func.func @transform_1(%arg0: i32) -> (i32, i32) {
    %c0_i32 = arith.constant 0 : i32
    %c0_i32_0 = arith.constant 0 : i32
    %c0_i32_1 = arith.constant 0 : i32
    return %c0_i32, %c0_i32_0 : i32, i32
  }
  func.func @transform_2(%arg0: i32) -> (i32, i32) {
    %c0_i32 = arith.constant 0 : i32
    %c0_i32_0 = arith.constant 0 : i32
    %c0_i32_1 = arith.constant 0 : i32
    return %c0_i32, %c0_i32_0 : i32, i32
  }
  func.func @transform_3(%arg0: i32) -> (i32, i32) {
    %c0_i32 = arith.constant 0 : i32
    %c0_i32_0 = arith.constant 0 : i32
    %c0_i32_1 = arith.constant 0 : i32
    return %c0_i32, %c0_i32_0 : i32, i32
  }
  func.func @transform_4(%arg0: i32) -> (i32, i32) {
    %c0_i32 = arith.constant 0 : i32
    %c0_i32_0 = arith.constant 0 : i32
    %c0_i32_1 = arith.constant 0 : i32
    return %c0_i32, %c0_i32_0 : i32, i32
  }
  func.func @transform_5(%arg0: i32) -> (i32, i32) {
    %c0_i32 = arith.constant 0 : i32
    %c0_i32_0 = arith.constant 0 : i32
    %c0_i32_1 = arith.constant 0 : i32
    return %c0_i32, %c0_i32_0 : i32, i32
  }
  func.func @transform_6(%arg0: i32) -> (i32, i32) {
    %c0_i32 = arith.constant 0 : i32
    %c0_i32_0 = arith.constant 0 : i32
    %c0_i32_1 = arith.constant 0 : i32
    return %c0_i32, %c0_i32_0 : i32, i32
  }
  func.func @transform_7(%arg0: i32) -> (i32, i32) {
    %c0_i32 = arith.constant 0 : i32
    %c0_i32_0 = arith.constant 0 : i32
    %c0_i32_1 = arith.constant 0 : i32
    return %c0_i32, %c0_i32_0 : i32, i32
  }
  func.func @transform_8(%arg0: i32) -> (i32, i32) {
    %c0_i32 = arith.constant 0 : i32
    %c0_i32_0 = arith.constant 0 : i32
    %c0_i32_1 = arith.constant 0 : i32
    return %c0_i32, %c0_i32_0 : i32, i32
  }
  func.func @transform_9(%arg0: i32) -> (i32, i32) {
    %c0_i32 = arith.constant 0 : i32
    %c0_i32_0 = arith.constant 0 : i32
    %c0_i32_1 = arith.constant 0 : i32
    return %c0_i32, %c0_i32_0 : i32, i32
  }
  func.func @transform_10(%arg0: i32) -> (i32, i32) {
    %c0_i32 = arith.constant 0 : i32
    %c0_i32_0 = arith.constant 0 : i32
    %c0_i32_1 = arith.constant 0 : i32
    return %c0_i32, %c0_i32_0 : i32, i32
  }
  func.func @transform_11(%arg0: i32) -> (i32, i32) {
    %c0_i32 = arith.constant 0 : i32
    %c0_i32_0 = arith.constant 0 : i32
    return %arg0, %c0_i32 : i32, i32
  }
}

</mosaic_0001>

<llo_original>
// kernel: forward.1
$region0: #{forward.1}
  #allocation0 [shape = 'u32[]', space=smem, size = 0x4, offset = 0x4, fixed_abs, tag = 'smem constant byte address 0x4 - core index']
  #allocation1 [shape = 'u32[72,128]{1,0:T(1,128)}', space=vmem, size = 0x9000, scoped, tag = 'internal scratch']
  %s0 = inlined_call_operand.vmem [shape: bf16[24,8,140], index: 0, kind: input, shape index: {}]
  %s1 = inlined_call_operand.hbm [shape: bf16[140,256], index: 1, kind: input, shape index: {}]
  %s2 = inlined_call_operand.vmem [shape: f32[1,128], index: 2, kind: input, shape index: {}]
  %s3 = inlined_call_operand.vmem [shape: bf16[640,256], index: 3, kind: input, shape index: {}]
  %s4 = inlined_call_operand.vmem [shape: f32[1,128], index: 4, kind: input, shape index: {}]
  %s5 = inlined_call_operand.hbm [shape: bf16[512,128], index: 5, kind: input, shape index: {}]
  %s6 = inlined_call_operand.vmem [shape: f32[1,128], index: 6, kind: input, shape index: {}]
  %s7 = inlined_call_operand.vmem [shape: bf16[128,128], index: 7, kind: input, shape index: {}]
  %s8 = inlined_call_operand.vmem [shape: f32[1,128], index: 8, kind: input, shape index: {}]
  %s9 = inlined_call_operand.vmem [shape: bf16[128,128], index: 9, kind: input, shape index: {}]
  %s10 = inlined_call_operand.vmem [shape: f32[1,128], index: 10, kind: input, shape index: {}]
  %s11 = inlined_call_operand.vmem [shape: f32[8,128], index: 11, kind: output, shape index: {}]
  %s12 = sld [smem:[#allocation0]]
  $region62: #{forward.1} parent=0
    _
  %s14 = ssub.s32 1, %s12
  %s15 = scalar_select 0, %s14, %s12
  $region1: #{forward.1} parent=0
    #allocation2 [shape = 'u8[73728]{0}', space=vmem, size = 0x12000, scoped, tag = 'input window, operand 1, single buffered']
    #allocation3 [shape = 's32[1]{0}', space=sflag, size = 0x4, scoped, tag = 'scoped memory for forward.1']
    #allocation4 [shape = 'u8[131072]{0}', space=vmem, size = 0x20000, scoped, tag = 'input window, operand 5, single buffered']
    #allocation5 [shape = 's32[1]{0}', space=sflag, size = 0x4, scoped, tag = 'scoped memory for forward.1']
    %16 = vsyncpa [#allocation3], 0
    %17 = vsyncpa [#allocation5], 0
    // Predicated region
    $region2: #{forward.1} parent=1 // pred_check
      _
    $region3: #{forward.1} parent=1 // pred_check_branch
      %19 = sbr.rel (0) target = $region5
    $region4: #{forward.1} parent=1 // pred_region
      _
    $region5: #{forward.1} parent=1 // pred_fallthru
      _
    // Predicated region
    $region6: #{forward.1} parent=1 // pred_check
      _
    $region7: #{forward.1} parent=1 // pred_check_branch
      %21 = sbr.rel (0) target = $region9
    $region8: #{forward.1} parent=1 // pred_region
      %23 = vsyncadd [#allocation3], 0
      %s24 = sshll.u32 %s1, 4
      %s25 = int_to_ptr.hbm [resolvable:$true] %s24
      %s26 = sshll.u32 [#allocation2], 4
      %s27 = int_to_ptr.vmem [resolvable:$true] %s26
      %32 = dma.hbm_to_vmem [thread:$0]  %s25, 2304, %s27, [#allocation3], 128, 128, 8
    $region9: #{forward.1} parent=1 // pred_fallthru
      _
    // Predicated region
    $region10: #{forward.1} parent=1 // pred_check
      _
    $region11: #{forward.1} parent=1 // pred_check_branch
      %34 = sbr.rel (0) target = $region13
    $region12: #{forward.1} parent=1 // pred_region
      _
    $region13: #{forward.1} parent=1 // pred_fallthru
      _
    // Predicated region
    $region14: #{forward.1} parent=1 // pred_check
      _
    $region15: #{forward.1} parent=1 // pred_check_branch
      %36 = sbr.rel (0) target = $region17
    $region16: #{forward.1} parent=1 // pred_region
      _
    $region17: #{forward.1} parent=1 // pred_fallthru
      _
    // Predicated region
    $region18: #{forward.1} parent=1 // pred_check
      _
    $region19: #{forward.1} parent=1 // pred_check_branch
      %38 = sbr.rel (0) target = $region21
    $region20: #{forward.1} parent=1 // pred_region
      _
    $region21: #{forward.1} parent=1 // pred_fallthru
      _
    // Predicated region
    $region22: #{forward.1} parent=1 // pred_check
      _
    $region23: #{forward.1} parent=1 // pred_check_branch
      %40 = sbr.rel (0) target = $region25
    $region24: #{forward.1} parent=1 // pred_region
      %42 = vsyncadd [#allocation5], 0
      %s43 = sshll.u32 %s5, 4
      %s44 = int_to_ptr.hbm [resolvable:$true] %s43
      %s45 = sshll.u32 [#allocation4], 4
      %s46 = int_to_ptr.vmem [resolvable:$true] %s45
      %51 = dma.hbm_to_vmem [thread:$0]  %s44, 4096, %s46, [#allocation5], 64, 64, 4
    $region25: #{forward.1} parent=1 // pred_fallthru
      _
    // Predicated region
    $region26: #{forward.1} parent=1 // pred_check
      _
    $region27: #{forward.1} parent=1 // pred_check_branch
      %53 = sbr.rel (0) target = $region29
    $region28: #{forward.1} parent=1 // pred_region
      _
    $region29: #{forward.1} parent=1 // pred_fallthru
      _
    // Predicated region
    $region30: #{forward.1} parent=1 // pred_check
      _
    $region31: #{forward.1} parent=1 // pred_check_branch
      %55 = sbr.rel (0) target = $region33
    $region32: #{forward.1} parent=1 // pred_region
      _
    $region33: #{forward.1} parent=1 // pred_fallthru
      _
    // Predicated region
    $region34: #{forward.1} parent=1 // pred_check
      _
    $region35: #{forward.1} parent=1 // pred_check_branch
      %57 = sbr.rel (0) target = $region37
    $region36: #{forward.1} parent=1 // pred_region
      _
    $region37: #{forward.1} parent=1 // pred_fallthru
      _
    // Predicated region
    $region38: #{forward.1} parent=1 // pred_check
      _
    $region39: #{forward.1} parent=1 // pred_check_branch
      %59 = sbr.rel (0) target = $region41
    $region40: #{forward.1} parent=1 // pred_region
      _
    $region41: #{forward.1} parent=1 // pred_fallthru
      _
    // Predicated region
    $region42: #{forward.1} parent=1 // pred_check
      _
    $region43: #{forward.1} parent=1 // pred_check_branch
      %61 = sbr.rel (0) target = $region45
    $region44: #{forward.1} parent=1 // pred_region
      _
    $region45: #{forward.1} parent=1 // pred_fallthru
      _
    // Predicated region
    $region46: #{forward.1} parent=1 // pred_check
      _
    $region47: #{forward.1} parent=1 // pred_check_branch
      %63 = sbr.rel (0) target = $region49
    $region48: #{forward.1} parent=1 // pred_region
      %65 = dma.done [#allocation3], 2304
    $region49: #{forward.1} parent=1 // pred_fallthru
      _
    // Predicated region
    $region50: #{forward.1} parent=1 // pred_check
      _
    $region51: #{forward.1} parent=1 // pred_check_branch
      %67 = sbr.rel (0) target = $region53
    $region52: #{forward.1} parent=1 // pred_region
      %69 = dma.done [#allocation5], 4096
    $region53: #{forward.1} parent=1 // pred_fallthru
      _
    %v71 = vld [vmem:[%s0] sm:$0xff]
    %v72 = vld [vmem:[%s0 + $0x8] sm:$0xff]
    %v73 = vld [vmem:[%s0 + $0x10] sm:$0xff]
    %v74 = vld [vmem:[%s0 + $0x18] sm:$0xff]
    %v75 = vld [vmem:[%s0 + $0x20] sm:$0xff]
    %v76 = vld [vmem:[%s0 + $0x28] sm:$0xff]
    %v77 = vld [vmem:[%s0 + $0x30] sm:$0xff]
    %v78 = vld [vmem:[%s0 + $0x38] sm:$0xff]
    %v79 = vld [vmem:[%s0 + $0x40] sm:$0xff]
    %v80 = vld [vmem:[%s0 + $0x48] sm:$0xff]
    %v81 = vld [vmem:[%s0 + $0x50] sm:$0xff]
    %v82 = vld [vmem:[%s0 + $0x58] sm:$0xff]
    %v83 = vld [vmem:[%s0 + $0x60] sm:$0xff]
    %v84 = vld [vmem:[%s0 + $0x68] sm:$0xff]
    %v85 = vld [vmem:[%s0 + $0x70] sm:$0xff]
    %v86 = vld [vmem:[%s0 + $0x78] sm:$0xff]
    %v87 = vld [vmem:[%s0 + $0x80] sm:$0xff]
    %v88 = vld [vmem:[%s0 + $0x88] sm:$0xff]
    %v89 = vld [vmem:[%s0 + $0x90] sm:$0xff]
    %v90 = vld [vmem:[%s0 + $0x98] sm:$0xff]
    %v91 = vld [vmem:[%s0 + $0xa0] sm:$0xff]
    %v92 = vld [vmem:[%s0 + $0xa8] sm:$0xff]
    %v93 = vld [vmem:[%s0 + $0xb0] sm:$0xff]
    %v94 = vld [vmem:[%s0 + $0xb8] sm:$0xff]
    %v95 = vld [vmem:[#allocation2] sm:$0xff]
    %v96 = vld [vmem:[#allocation2 + $0x8] sm:$0xff]
    %v97 = vld [vmem:[#allocation2 + $0x10] sm:$0xff]
    %v98 = vld [vmem:[#allocation2 + $0x18] sm:$0xff]
    %v99 = vld [vmem:[#allocation2 + $0x20] sm:$0xff]
    %v100 = vld [vmem:[#allocation2 + $0x28] sm:$0xff]
    %v101 = vld [vmem:[#allocation2 + $0x30] sm:$0xff]
    %v102 = vld [vmem:[#allocation2 + $0x38] sm:$0xff]
    %v103 = vld [vmem:[#allocation2 + $0x40] sm:$0xff]
    %v104 = vld [vmem:[#allocation2 + $0x48] sm:$0xff]
    %v105 = vld [vmem:[#allocation2 + $0x50] sm:$0xff]
    %v106 = vld [vmem:[#allocation2 + $0x58] sm:$0xff]
    %v107 = vld [vmem:[#allocation2 + $0x60] sm:$0xff]
    %v108 = vld [vmem:[#allocation2 + $0x68] sm:$0xff]
    %v109 = vld [vmem:[#allocation2 + $0x70] sm:$0xff]
    %v110 = vld [vmem:[#allocation2 + $0x78] sm:$0xff]
    %v111 = vld [vmem:[#allocation2 + $0x80] sm:$0xff]
    %v112 = vld [vmem:[#allocation2 + $0x88] sm:$0x33]
    %v137 = vunpack.c.l.b16 %v71
    %v138 = vunpack.c.h.b16 %v71
    %v139 = vunpack.c.l.b16 %v72
    %v140 = vunpack.c.h.b16 %v72
    %v141 = vunpack.c.l.b16 %v73
    %v142 = vunpack.c.h.b16 %v73
    %v143 = vunpack.c.l.b16 %v74
    %v144 = vunpack.c.h.b16 %v74
    %v145 = vunpack.c.l.b16 %v75
    %v146 = vunpack.c.h.b16 %v75
    %v147 = vunpack.c.l.b16 %v76
    %v148 = vunpack.c.h.b16 %v76
    %v149 = vunpack.c.l.b16 %v77
    %v150 = vunpack.c.h.b16 %v77
    %v151 = vunpack.c.l.b16 %v78
    %v152 = vunpack.c.h.b16 %v78
    %v153 = vunpack.c.l.b16 %v79
    %v154 = vunpack.c.h.b16 %v79
    %v155 = vunpack.c.l.b16 %v80
    %v156 = vunpack.c.h.b16 %v80
    %v157 = vunpack.c.l.b16 %v81
    %v158 = vunpack.c.h.b16 %v81
    %v159 = vunpack.c.l.b16 %v82
    %v160 = vunpack.c.h.b16 %v82
    %v161 = vunpack.c.l.b16 %v83
    %v162 = vunpack.c.h.b16 %v83
    %v163 = vunpack.c.l.b16 %v84
    %v164 = vunpack.c.h.b16 %v84
    %v165 = vunpack.c.l.b16 %v85
    %v166 = vunpack.c.h.b16 %v85
    %v167 = vunpack.c.l.b16 %v86
    %v168 = vunpack.c.h.b16 %v86
    %v169 = vunpack.c.l.b16 %v87
    %v170 = vunpack.c.h.b16 %v87
    %v171 = vunpack.c.l.b16 %v88
    %v172 = vunpack.c.h.b16 %v88
    %v173 = vunpack.c.l.b16 %v89
    %v174 = vunpack.c.h.b16 %v89
    %v175 = vunpack.c.l.b16 %v90
    %v176 = vunpack.c.h.b16 %v90
    %v177 = vunpack.c.l.b16 %v91
    %v178 = vunpack.c.h.b16 %v91
    %v179 = vunpack.c.l.b16 %v92
    %v180 = vunpack.c.h.b16 %v92
    %v181 = vunpack.c.l.b16 %v93
    %v182 = vunpack.c.h.b16 %v93
    %v183 = vunpack.c.l.b16 %v94
    %v184 = vunpack.c.h.b16 %v94
    %v185 = vpack.c.b16 %v139, %v137
    %v186 = vpack.c.b16 %v140, %v138
    %v187 = vpack.c.b16 %v143, %v141
    %v188 = vpack.c.b16 %v144, %v142
    %v189 = vpack.c.b16 %v147, %v145
    %v190 = vpack.c.b16 %v148, %v146
    %v191 = vpack.c.b16 %v151, %v149
    %v192 = vpack.c.b16 %v152, %v150
    %v193 = vpack.c.b16 %v155, %v153
    %v194 = vpack.c.b16 %v156, %v154
    %v195 = vpack.c.b16 %v159, %v157
    %v196 = vpack.c.b16 %v160, %v158
    %v197 = vpack.c.b16 %v163, %v161
    %v198 = vpack.c.b16 %v164, %v162
    %v199 = vpack.c.b16 %v167, %v165
    %v200 = vpack.c.b16 %v168, %v166
    %v201 = vpack.c.b16 %v171, %v169
    %v202 = vpack.c.b16 %v172, %v170
    %v203 = vpack.c.b16 %v175, %v173
    %v204 = vpack.c.b16 %v176, %v174
    %v205 = vpack.c.b16 %v179, %v177
    %v206 = vpack.c.b16 %v180, %v178
    %v207 = vpack.c.b16 %v183, %v181
    %v208 = vpack.c.b16 %v184, %v182
    %v239 = vunpack.c.l.b16 %v95
    %v240 = vunpack.c.h.b16 %v95
    %v241 = vunpack.c.l.b16 %v96
    %v242 = vunpack.c.h.b16 %v96
    %v243 = vunpack.c.l.b16 %v97
    %v244 = vunpack.c.h.b16 %v97
    %v245 = vunpack.c.l.b16 %v98
    %v246 = vunpack.c.h.b16 %v98
    %v247 = vunpack.c.l.b16 %v99
    %v248 = vunpack.c.h.b16 %v99
    %v249 = vunpack.c.l.b16 %v100
    %v250 = vunpack.c.h.b16 %v100
    %v251 = vunpack.c.l.b16 %v101
    %v252 = vunpack.c.h.b16 %v101
    %v253 = vunpack.c.l.b16 %v102
    %v254 = vunpack.c.h.b16 %v102
    %v255 = vunpack.c.l.b16 %v103
    %v256 = vunpack.c.h.b16 %v103
    %v257 = vunpack.c.l.b16 %v104
    %v258 = vunpack.c.h.b16 %v104
    %v259 = vunpack.c.l.b16 %v105
    %v260 = vunpack.c.h.b16 %v105
    %v261 = vunpack.c.l.b16 %v106
    %v262 = vunpack.c.h.b16 %v106
    %v263 = vunpack.c.l.b16 %v107
    %v264 = vunpack.c.h.b16 %v107
    %v265 = vunpack.c.l.b16 %v108
    %v266 = vunpack.c.h.b16 %v108
    %v267 = vunpack.c.l.b16 %v109
    %v268 = vunpack.c.h.b16 %v109
    %v269 = vunpack.c.l.b16 %v110
    %v270 = vunpack.c.h.b16 %v110
    %v271 = vunpack.c.l.b16 %v111
    %v272 = vunpack.c.h.b16 %v111
    %v273 = vunpack.c.l.b16 %v112
    %v274 = vunpack.c.h.b16 %v112
    %v275 = vpack.c.b16 %v241, %v239
    %v276 = vpack.c.b16 %v242, %v240
    %v277 = vpack.c.b16 %v245, %v243
    %v278 = vpack.c.b16 %v246, %v244
    %v279 = vpack.c.b16 %v249, %v247
    %v280 = vpack.c.b16 %v250, %v248
    %v281 = vpack.c.b16 %v253, %v251
    %v282 = vpack.c.b16 %v254, %v252
    %v283 = vpack.c.b16 %v257, %v255
    %v284 = vpack.c.b16 %v258, %v256
    %v285 = vpack.c.b16 %v261, %v259
    %v286 = vpack.c.b16 %v262, %v260
    %v287 = vpack.c.b16 %v265, %v263
    %v288 = vpack.c.b16 %v266, %v264
    %v289 = vpack.c.b16 %v269, %v267
    %v290 = vpack.c.b16 %v270, %v268
    %v291 = vpack.c.b16 %v273, %v271
    %v292 = vpack.c.b16 %v274, %v272
    %vm309 = vcmask 97280
    %v311 = vsel %vm309, %v186, 0
    %v314 = vsel %vm309, %v188, 0
    %v317 = vsel %vm309, %v190, 0
    %v320 = vsel %vm309, %v192, 0
    %v323 = vsel %vm309, %v194, 0
    %v326 = vsel %vm309, %v196, 0
    %v329 = vsel %vm309, %v198, 0
    %v332 = vsel %vm309, %v200, 0
    %v335 = vsel %vm309, %v202, 0
    %v338 = vsel %vm309, %v204, 0
    %v341 = vsel %vm309, %v206, 0
    %v344 = vsel %vm309, %v208, 0
    %vm346 = vcmask 1045504
    %v348 = vsel %vm346, %v291, 0
    %v351 = vsel %vm346, %v292, 0
    %353 = vmatpush.bf16.msra.mxu0 %v289
    %354 = vmatpush.bf16.msra.mxu0 %v287
    %355 = vmatpush.bf16.msra.mxu0 %v285
    %356 = vmatpush.bf16.msra.mxu0 %v283
    %357 = vmatpush.bf16.msra.mxu0 %v281
    %358 = vmatpush.bf16.msra.mxu0 %v279
    %359 = vmatpush.bf16.msra.mxu0 %v277
    %360 = vmatpush.bf16.msra.mxu0 %v275
    %361 = vmatmul.bf16.gmra.mxu0 %v185
    %v362 = vpop.f32.mrf.mxu0
    %v363 = vadd.f32 0.0, %v362
    %v364 = vpop.f32.mrf.mxu0
    %v365 = vadd.f32 0.0, %v364
    %366 = vmatmul.bf16.gmra.mxu0 %v187
    %v367 = vpop.f32.mrf.mxu0
    %v368 = vadd.f32 0.0, %v367
    %v369 = vpop.f32.mrf.mxu0
    %v370 = vadd.f32 0.0, %v369
    %371 = vmatmul.bf16.gmra.mxu0 %v189
    %v372 = vpop.f32.mrf.mxu0
    %v373 = vadd.f32 0.0, %v372
    %v374 = vpop.f32.mrf.mxu0
    %v375 = vadd.f32 0.0, %v374
    %376 = vmatmul.bf16.gmra.mxu0 %v191
    %v377 = vpop.f32.mrf.mxu0
    %v378 = vadd.f32 0.0, %v377
    %v379 = vpop.f32.mrf.mxu0
    %v380 = vadd.f32 0.0, %v379
    %381 = vmatmul.bf16.gmra.mxu0 %v193
    %v382 = vpop.f32.mrf.mxu0
    %v383 = vadd.f32 0.0, %v382
    %v384 = vpop.f32.mrf.mxu0
    %v385 = vadd.f32 0.0, %v384
    %386 = vmatmul.bf16.gmra.mxu0 %v195
    %v387 = vpop.f32.mrf.mxu0
    %v388 = vadd.f32 0.0, %v387
    %v389 = vpop.f32.mrf.mxu0
    %v390 = vadd.f32 0.0, %v389
    %391 = vmatmul.bf16.gmra.mxu0 %v197
    %v392 = vpop.f32.mrf.mxu0
    %v393 = vadd.f32 0.0, %v392
    %v394 = vpop.f32.mrf.mxu0
    %v395 = vadd.f32 0.0, %v394
    %396 = vmatmul.bf16.gmra.mxu0 %v199
    %v397 = vpop.f32.mrf.mxu0
    %v398 = vadd.f32 0.0, %v397
    %v399 = vpop.f32.mrf.mxu0
    %v400 = vadd.f32 0.0, %v399
    %401 = vmatmul.bf16.gmra.mxu0 %v201
    %v402 = vpop.f32.mrf.mxu0
    %v403 = vadd.f32 0.0, %v402
    %v404 = vpop.f32.mrf.mxu0
    %v405 = vadd.f32 0.0, %v404
    %406 = vmatmul.bf16.gmra.mxu0 %v203
    %v407 = vpop.f32.mrf.mxu0
    %v408 = vadd.f32 0.0, %v407
    %v409 = vpop.f32.mrf.mxu0
    %v410 = vadd.f32 0.0, %v409
    %411 = vmatmul.bf16.gmra.mxu0 %v205
    %v412 = vpop.f32.mrf.mxu0
    %v413 = vadd.f32 0.0, %v412
    %v414 = vpop.f32.mrf.mxu0
    %v415 = vadd.f32 0.0, %v414
    %416 = vmatmul.bf16.gmra.mxu0 %v207
    %v417 = vpop.f32.mrf.mxu0
    %v418 = vadd.f32 0.0, %v417
    %v419 = vpop.f32.mrf.mxu0
    %v420 = vadd.f32 0.0, %v419
    %421 = vdwg.mxu0
    %422 = vmatpush.bf16.msra.mxu0 0
    %423 = vmatpush.bf16.msra.mxu0 0
    %424 = vmatpush.bf16.msra.mxu0 0
    %425 = vmatpush.bf16.msra.mxu0 0
    %426 = vmatpush.bf16.msra.mxu0 0
    %427 = vmatpush.bf16.msra.mxu0 0
    %428 = vmatpush.bf16.msra.mxu0 0
    %429 = vmatpush.bf16.msra.mxu0 %v348
    %430 = vmatmul.bf16.gmra.mxu0 %v311
    %v431 = vpop.f32.mrf.mxu0
    %v432 = vadd.f32 %v363, %v431
    %v433 = vpop.f32.mrf.mxu0
    %v434 = vadd.f32 %v365, %v433
    %435 = vmatmul.bf16.gmra.mxu0 %v314
    %v436 = vpop.f32.mrf.mxu0
    %v437 = vadd.f32 %v368, %v436
    %v438 = vpop.f32.mrf.mxu0
    %v439 = vadd.f32 %v370, %v438
    %440 = vmatmul.bf16.gmra.mxu0 %v317
    %v441 = vpop.f32.mrf.mxu0
    %v442 = vadd.f32 %v373, %v441
    %v443 = vpop.f32.mrf.mxu0
    %v444 = vadd.f32 %v375, %v443
    %445 = vmatmul.bf16.gmra.mxu0 %v320
    %v446 = vpop.f32.mrf.mxu0
    %v447 = vadd.f32 %v378, %v446
    %v448 = vpop.f32.mrf.mxu0
    %v449 = vadd.f32 %v380, %v448
    %450 = vmatmul.bf16.gmra.mxu0 %v323
    %v451 = vpop.f32.mrf.mxu0
    %v452 = vadd.f32 %v383, %v451
    %v453 = vpop.f32.mrf.mxu0
    %v454 = vadd.f32 %v385, %v453
    %455 = vmatmul.bf16.gmra.mxu0 %v326
    %v456 = vpop.f32.mrf.mxu0
    %v457 = vadd.f32 %v388, %v456
    %v458 = vpop.f32.mrf.mxu0
    %v459 = vadd.f32 %v390, %v458
    %460 = vmatmul.bf16.gmra.mxu0 %v329
    %v461 = vpop.f32.mrf.mxu0
    %v462 = vadd.f32 %v393, %v461
    %v463 = vpop.f32.mrf.mxu0
    %v464 = vadd.f32 %v395, %v463
    %465 = vmatmul.bf16.gmra.mxu0 %v332
    %v466 = vpop.f32.mrf.mxu0
    %v467 = vadd.f32 %v398, %v466
    %v468 = vpop.f32.mrf.mxu0
    %v469 = vadd.f32 %v400, %v468
    %470 = vmatmul.bf16.gmra.mxu0 %v335
    %v471 = vpop.f32.mrf.mxu0
    %v472 = vadd.f32 %v403, %v471
    %v473 = vpop.f32.mrf.mxu0
    %v474 = vadd.f32 %v405, %v473
    %475 = vmatmul.bf16.gmra.mxu0 %v338
    %v476 = vpop.f32.mrf.mxu0
    %v477 = vadd.f32 %v408, %v476
    %v478 = vpop.f32.mrf.mxu0
    %v479 = vadd.f32 %v410, %v478
    %480 = vmatmul.bf16.gmra.mxu0 %v341
    %v481 = vpop.f32.mrf.mxu0
    %v482 = vadd.f32 %v413, %v481
    %v483 = vpop.f32.mrf.mxu0
    %v484 = vadd.f32 %v415, %v483
    %485 = vmatmul.bf16.gmra.mxu0 %v344
    %v486 = vpop.f32.mrf.mxu0
    %v487 = vadd.f32 %v418, %v486
    %v488 = vpop.f32.mrf.mxu0
    %v489 = vadd.f32 %v420, %v488
    %490 = vdwg.mxu0
    %491 = vmatpush.bf16.msra.mxu0 %v290
    %492 = vmatpush.bf16.msra.mxu0 %v288
    %493 = vmatpush.bf16.msra.mxu0 %v286
    %494 = vmatpush.bf16.msra.mxu0 %v284
    %495 = vmatpush.bf16.msra.mxu0 %v282
    %496 = vmatpush.bf16.msra.mxu0 %v280
    %497 = vmatpush.bf16.msra.mxu0 %v278
    %498 = vmatpush.bf16.msra.mxu0 %v276
    %499 = vmatmul.bf16.gmra.mxu0 %v185
    %v500 = vpop.f32.mrf.mxu0
    %v501 = vadd.f32 0.0, %v500
    %v502 = vpop.f32.mrf.mxu0
    %v503 = vadd.f32 0.0, %v502
    %504 = vmatmul.bf16.gmra.mxu0 %v187
    %v505 = vpop.f32.mrf.mxu0
    %v506 = vadd.f32 0.0, %v505
    %v507 = vpop.f32.mrf.mxu0
    %v508 = vadd.f32 0.0, %v507
    %509 = vmatmul.bf16.gmra.mxu0 %v189
    %v510 = vpop.f32.mrf.mxu0
    %v511 = vadd.f32 0.0, %v510
    %v512 = vpop.f32.mrf.mxu0
    %v513 = vadd.f32 0.0, %v512
    %514 = vmatmul.bf16.gmra.mxu0 %v191
    %v515 = vpop.f32.mrf.mxu0
    %v516 = vadd.f32 0.0, %v515
    %v517 = vpop.f32.mrf.mxu0
    %v518 = vadd.f32 0.0, %v517
    %519 = vmatmul.bf16.gmra.mxu0 %v193
    %v520 = vpop.f32.mrf.mxu0
    %v521 = vadd.f32 0.0, %v520
    %v522 = vpop.f32.mrf.mxu0
    %v523 = vadd.f32 0.0, %v522
    %524 = vmatmul.bf16.gmra.mxu0 %v195
    %v525 = vpop.f32.mrf.mxu0
    %v526 = vadd.f32 0.0, %v525
    %v527 = vpop.f32.mrf.mxu0
    %v528 = vadd.f32 0.0, %v527
    %529 = vmatmul.bf16.gmra.mxu0 %v197
    %v530 = vpop.f32.mrf.mxu0
    %v531 = vadd.f32 0.0, %v530
    %v532 = vpop.f32.mrf.mxu0
    %v533 = vadd.f32 0.0, %v532
    %534 = vmatmul.bf16.gmra.mxu0 %v199
    %v535 = vpop.f32.mrf.mxu0
    %v536 = vadd.f32 0.0, %v535
    %v537 = vpop.f32.mrf.mxu0
    %v538 = vadd.f32 0.0, %v537
    %539 = vmatmul.bf16.gmra.mxu0 %v201
    %v540 = vpop.f32.mrf.mxu0
    %v541 = vadd.f32 0.0, %v540
    %v542 = vpop.f32.mrf.mxu0
    %v543 = vadd.f32 0.0, %v542
    %544 = vmatmul.bf16.gmra.mxu0 %v203
    %v545 = vpop.f32.mrf.mxu0
    %v546 = vadd.f32 0.0, %v545
    %v547 = vpop.f32.mrf.mxu0
    %v548 = vadd.f32 0.0, %v547
    %549 = vmatmul.bf16.gmra.mxu0 %v205
    %v550 = vpop.f32.mrf.mxu0
    %v551 = vadd.f32 0.0, %v550
    %v552 = vpop.f32.mrf.mxu0
    %v553 = vadd.f32 0.0, %v552
    %554 = vmatmul.bf16.gmra.mxu0 %v207
    %v555 = vpop.f32.mrf.mxu0
    %v556 = vadd.f32 0.0, %v555
    %v557 = vpop.f32.mrf.mxu0
    %v558 = vadd.f32 0.0, %v557
    %559 = vdwg.mxu0
    %560 = vmatpush.bf16.msra.mxu0 0
    %561 = vmatpush.bf16.msra.mxu0 0
    %562 = vmatpush.bf16.msra.mxu0 0
    %563 = vmatpush.bf16.msra.mxu0 0
    %564 = vmatpush.bf16.msra.mxu0 0
    %565 = vmatpush.bf16.msra.mxu0 0
    %566 = vmatpush.bf16.msra.mxu0 0
    %567 = vmatpush.bf16.msra.mxu0 %v351
    %568 = vmatmul.bf16.gmra.mxu0 %v311
    %v569 = vpop.f32.mrf.mxu0
    %v570 = vadd.f32 %v501, %v569
    %v571 = vpop.f32.mrf.mxu0
    %v572 = vadd.f32 %v503, %v571
    %573 = vmatmul.bf16.gmra.mxu0 %v314
    %v574 = vpop.f32.mrf.mxu0
    %v575 = vadd.f32 %v506, %v574
    %v576 = vpop.f32.mrf.mxu0
    %v577 = vadd.f32 %v508, %v576
    %578 = vmatmul.bf16.gmra.mxu0 %v317
    %v579 = vpop.f32.mrf.mxu0
    %v580 = vadd.f32 %v511, %v579
    %v581 = vpop.f32.mrf.mxu0
    %v582 = vadd.f32 %v513, %v581
    %583 = vmatmul.bf16.gmra.mxu0 %v320
    %v584 = vpop.f32.mrf.mxu0
    %v585 = vadd.f32 %v516, %v584
    %v586 = vpop.f32.mrf.mxu0
    %v587 = vadd.f32 %v518, %v586
    %588 = vmatmul.bf16.gmra.mxu0 %v323
    %v589 = vpop.f32.mrf.mxu0
    %v590 = vadd.f32 %v521, %v589
    %v591 = vpop.f32.mrf.mxu0
    %v592 = vadd.f32 %v523, %v591
    %593 = vmatmul.bf16.gmra.mxu0 %v326
    %v594 = vpop.f32.mrf.mxu0
    %v595 = vadd.f32 %v526, %v594
    %v596 = vpop.f32.mrf.mxu0
    %v597 = vadd.f32 %v528, %v596
    %598 = vmatmul.bf16.gmra.mxu0 %v329
    %v599 = vpop.f32.mrf.mxu0
    %v600 = vadd.f32 %v531, %v599
    %v601 = vpop.f32.mrf.mxu0
    %v602 = vadd.f32 %v533, %v601
    %603 = vmatmul.bf16.gmra.mxu0 %v332
    %v604 = vpop.f32.mrf.mxu0
    %v605 = vadd.f32 %v536, %v604
    %v606 = vpop.f32.mrf.mxu0
    %v607 = vadd.f32 %v538, %v606
    %608 = vmatmul.bf16.gmra.mxu0 %v335
    %v609 = vpop.f32.mrf.mxu0
    %v610 = vadd.f32 %v541, %v609
    %v611 = vpop.f32.mrf.mxu0
    %v612 = vadd.f32 %v543, %v611
    %613 = vmatmul.bf16.gmra.mxu0 %v338
    %v614 = vpop.f32.mrf.mxu0
    %v615 = vadd.f32 %v546, %v614
    %v616 = vpop.f32.mrf.mxu0
    %v617 = vadd.f32 %v548, %v616
    %618 = vmatmul.bf16.gmra.mxu0 %v341
    %v619 = vpop.f32.mrf.mxu0
    %v620 = vadd.f32 %v551, %v619
    %v621 = vpop.f32.mrf.mxu0
    %v622 = vadd.f32 %v553, %v621
    %623 = vmatmul.bf16.gmra.mxu0 %v344
    %v624 = vpop.f32.mrf.mxu0
    %v625 = vadd.f32 %v556, %v624
    %v626 = vpop.f32.mrf.mxu0
    %v627 = vadd.f32 %v558, %v626
    %628 = vdwg.mxu0
    %v629 = vmax.f32 %v432, %v570
    %v630 = vmax.f32 %v434, %v572
    %v631 = vmax.f32 %v437, %v575
    %v632 = vmax.f32 %v439, %v577
    %v633 = vmax.f32 %v442, %v580
    %v634 = vmax.f32 %v444, %v582
    %v635 = vmax.f32 %v447, %v585
    %v636 = vmax.f32 %v449, %v587
    %v637 = vmax.f32 %v452, %v590
    %v638 = vmax.f32 %v454, %v592
    %v639 = vmax.f32 %v457, %v595
    %v640 = vmax.f32 %v459, %v597
    %v641 = vmax.f32 %v462, %v600
    %v642 = vmax.f32 %v464, %v602
    %v643 = vmax.f32 %v467, %v605
    %v644 = vmax.f32 %v469, %v607
    %v645 = vmax.f32 %v472, %v610
    %v646 = vmax.f32 %v474, %v612
    %v647 = vmax.f32 %v477, %v615
    %v648 = vmax.f32 %v479, %v617
    %v649 = vmax.f32 %v482, %v620
    %v650 = vmax.f32 %v484, %v622
    %v651 = vmax.f32 %v487, %v625
    %v652 = vmax.f32 %v489, %v627
    %v653 = vmax.f32 %v629, %v630
    %v654 = vmax.f32 %v631, %v632
    %v655 = vmax.f32 %v633, %v634
    %v656 = vmax.f32 %v635, %v636
    %v657 = vmax.f32 %v637, %v638
    %v658 = vmax.f32 %v639, %v640
    %v659 = vmax.f32 %v641, %v642
    %v660 = vmax.f32 %v643, %v644
    %v661 = vmax.f32 %v645, %v646
    %v662 = vmax.f32 %v647, %v648
    %v663 = vmax.f32 %v649, %v650
    %v664 = vmax.f32 %v651, %v652
    %v665 = vld [vmem:[%s2] sm:$0x1]
    %v667 = vperm.slane %v665, 0
    %v669 = vadd.f32 %v653, %v667
    %v670 = vadd.f32 %v654, %v667
    %v671 = vadd.f32 %v655, %v667
    %v672 = vadd.f32 %v656, %v667
    %v673 = vadd.f32 %v657, %v667
    %v674 = vadd.f32 %v658, %v667
    %v675 = vadd.f32 %v659, %v667
    %v676 = vadd.f32 %v660, %v667
    %v677 = vadd.f32 %v661, %v667
    %v678 = vadd.f32 %v662, %v667
    %v679 = vadd.f32 %v663, %v667
    %v680 = vadd.f32 %v664, %v667
    %v681 = vmax.f32 %v669, 0.0
    %v682 = vmax.f32 %v670, 0.0
    %v683 = vmax.f32 %v671, 0.0
    %v684 = vmax.f32 %v672, 0.0
    %v685 = vmax.f32 %v673, 0.0
    %v686 = vmax.f32 %v674, 0.0
    %v687 = vmax.f32 %v675, 0.0
    %v688 = vmax.f32 %v676, 0.0
    %v689 = vmax.f32 %v677, 0.0
    %v690 = vmax.f32 %v678, 0.0
    %v691 = vmax.f32 %v679, 0.0
    %v692 = vmax.f32 %v680, 0.0
    %v693 = vpack.c.bf16 %v681, %v681
    %v694 = vpack.c.bf16 %v682, %v682
    %v695 = vpack.c.bf16 %v683, %v683
    %v696 = vpack.c.bf16 %v684, %v684
    %v697 = vpack.c.bf16 %v685, %v685
    %v698 = vpack.c.bf16 %v686, %v686
    %v699 = vpack.c.bf16 %v687, %v687
    %v700 = vpack.c.bf16 %v688, %v688
    %v701 = vpack.c.bf16 %v689, %v689
    %v702 = vpack.c.bf16 %v690, %v690
    %v703 = vpack.c.bf16 %v691, %v691
    %v704 = vpack.c.bf16 %v692, %v692
    %v717 = vunpack.c.l.b16 %v693
    %v718 = vunpack.c.l.b16 %v694
    %v719 = vunpack.c.l.b16 %v695
    %v720 = vunpack.c.l.b16 %v696
    %v721 = vunpack.c.l.b16 %v697
    %v722 = vunpack.c.l.b16 %v698
    %v723 = vunpack.c.l.b16 %v699
    %v724 = vunpack.c.l.b16 %v700
    %v725 = vunpack.c.l.b16 %v701
    %v726 = vunpack.c.l.b16 %v702
    %v727 = vunpack.c.l.b16 %v703
    %v728 = vunpack.c.l.b16 %v704
    %v729 = vld [vmem:[%s3] sm:$0xff]
    %v730 = vld [vmem:[%s3 + $0x8] sm:$0xff]
    %v731 = vld [vmem:[%s3 + $0x10] sm:$0xff]
    %v732 = vld [vmem:[%s3 + $0x18] sm:$0xff]
    %v733 = vld [vmem:[%s3 + $0x20] sm:$0xff]
    %v734 = vld [vmem:[%s3 + $0x28] sm:$0xff]
    %v735 = vld [vmem:[%s3 + $0x30] sm:$0xff]
    %v736 = vld [vmem:[%s3 + $0x38] sm:$0xff]
    %v737 = vld [vmem:[%s3 + $0x40] sm:$0xff]
    %v738 = vld [vmem:[%s3 + $0x48] sm:$0xff]
    %v739 = vld [vmem:[%s3 + $0x50] sm:$0xff]
    %v740 = vld [vmem:[%s3 + $0x58] sm:$0xff]
    %v741 = vld [vmem:[%s3 + $0x60] sm:$0xff]
    %v742 = vld [vmem:[%s3 + $0x68] sm:$0xff]
    %v743 = vld [vmem:[%s3 + $0x70] sm:$0xff]
    %v744 = vld [vmem:[%s3 + $0x78] sm:$0xff]
    %v745 = vld [vmem:[%s3 + $0x80] sm:$0xff]
    %v746 = vld [vmem:[%s3 + $0x88] sm:$0xff]
    %v747 = vld [vmem:[%s3 + $0x90] sm:$0xff]
    %v748 = vld [vmem:[%s3 + $0x98] sm:$0xff]
    %v749 = vld [vmem:[%s3 + $0xa0] sm:$0xff]
    %v750 = vld [vmem:[%s3 + $0xa8] sm:$0xff]
    %v751 = vld [vmem:[%s3 + $0xb0] sm:$0xff]
    %v752 = vld [vmem:[%s3 + $0xb8] sm:$0xff]
    %v753 = vld [vmem:[%s3 + $0xc0] sm:$0xff]
    %v754 = vld [vmem:[%s3 + $0xc8] sm:$0xff]
    %v755 = vld [vmem:[%s3 + $0xd0] sm:$0xff]
    %v756 = vld [vmem:[%s3 + $0xd8] sm:$0xff]
    %v757 = vld [vmem:[%s3 + $0xe0] sm:$0xff]
    %v758 = vld [vmem:[%s3 + $0xe8] sm:$0xff]
    %v759 = vld [vmem:[%s3 + $0xf0] sm:$0xff]
    %v760 = vld [vmem:[%s3 + $0xf8] sm:$0xff]
    %v761 = vld [vmem:[%s3 + $0x100] sm:$0xff]
    %v762 = vld [vmem:[%s3 + $0x108] sm:$0xff]
    %v763 = vld [vmem:[%s3 + $0x110] sm:$0xff]
    %v764 = vld [vmem:[%s3 + $0x118] sm:$0xff]
    %v765 = vld [vmem:[%s3 + $0x120] sm:$0xff]
    %v766 = vld [vmem:[%s3 + $0x128] sm:$0xff]
    %v767 = vld [vmem:[%s3 + $0x130] sm:$0xff]
    %v768 = vld [vmem:[%s3 + $0x138] sm:$0xff]
    %v769 = vld [vmem:[%s3 + $0x140] sm:$0xff]
    %v770 = vld [vmem:[%s3 + $0x148] sm:$0xff]
    %v771 = vld [vmem:[%s3 + $0x150] sm:$0xff]
    %v772 = vld [vmem:[%s3 + $0x158] sm:$0xff]
    %v773 = vld [vmem:[%s3 + $0x160] sm:$0xff]
    %v774 = vld [vmem:[%s3 + $0x168] sm:$0xff]
    %v775 = vld [vmem:[%s3 + $0x170] sm:$0xff]
    %v776 = vld [vmem:[%s3 + $0x178] sm:$0xff]
    %v777 = vld [vmem:[%s3 + $0x180] sm:$0xff]
    %v778 = vld [vmem:[%s3 + $0x188] sm:$0xff]
    %v779 = vld [vmem:[%s3 + $0x190] sm:$0xff]
    %v780 = vld [vmem:[%s3 + $0x198] sm:$0xff]
    %v781 = vld [vmem:[%s3 + $0x1a0] sm:$0xff]
    %v782 = vld [vmem:[%s3 + $0x1a8] sm:$0xff]
    %v783 = vld [vmem:[%s3 + $0x1b0] sm:$0xff]
    %v784 = vld [vmem:[%s3 + $0x1b8] sm:$0xff]
    %v785 = vld [vmem:[%s3 + $0x1c0] sm:$0xff]
    %v786 = vld [vmem:[%s3 + $0x1c8] sm:$0xff]
    %v787 = vld [vmem:[%s3 + $0x1d0] sm:$0xff]
    %v788 = vld [vmem:[%s3 + $0x1d8] sm:$0xff]
    %v789 = vld [vmem:[%s3 + $0x1e0] sm:$0xff]
    %v790 = vld [vmem:[%s3 + $0x1e8] sm:$0xff]
    %v791 = vld [vmem:[%s3 + $0x1f0] sm:$0xff]
    %v792 = vld [vmem:[%s3 + $0x1f8] sm:$0xff]
    %v793 = vld [vmem:[%s3 + $0x200] sm:$0xff]
    %v794 = vld [vmem:[%s3 + $0x208] sm:$0xff]
    %v795 = vld [vmem:[%s3 + $0x210] sm:$0xff]
    %v796 = vld [vmem:[%s3 + $0x218] sm:$0xff]
    %v797 = vld [vmem:[%s3 + $0x220] sm:$0xff]
    %v798 = vld [vmem:[%s3 + $0x228] sm:$0xff]
    %v799 = vld [vmem:[%s3 + $0x230] sm:$0xff]
    %v800 = vld [vmem:[%s3 + $0x238] sm:$0xff]
    %v801 = vld [vmem:[%s3 + $0x240] sm:$0xff]
    %v802 = vld [vmem:[%s3 + $0x248] sm:$0xff]
    %v803 = vld [vmem:[%s3 + $0x250] sm:$0xff]
    %v804 = vld [vmem:[%s3 + $0x258] sm:$0xff]
    %v805 = vld [vmem:[%s3 + $0x260] sm:$0xff]
    %v806 = vld [vmem:[%s3 + $0x268] sm:$0xff]
    %v807 = vld [vmem:[%s3 + $0x270] sm:$0xff]
    %v808 = vld [vmem:[%s3 + $0x278] sm:$0xff]
    %v809 = vpack.c.b16 %v718, %v717
    %v810 = vpack.c.b16 %v719, %v718
    %v811 = vpack.c.b16 %v720, %v719
    %v812 = vpack.c.b16 %v721, %v720
    %v813 = vpack.c.b16 %v722, %v721
    %v814 = vpack.c.b16 %v723, %v722
    %v815 = vpack.c.b16 %v724, %v723
    %v816 = vpack.c.b16 %v725, %v724
    %v817 = vpack.c.b16 %v726, %v725
    %v818 = vpack.c.b16 %v727, %v726
    %v819 = vpack.c.b16 %v728, %v727
    %v911 = vunpack.c.l.b16 %v729
    %v912 = vunpack.c.h.b16 %v729
    %v913 = vunpack.c.l.b16 %v730
    %v914 = vunpack.c.h.b16 %v730
    %v915 = vunpack.c.l.b16 %v731
    %v916 = vunpack.c.h.b16 %v731
    %v917 = vunpack.c.l.b16 %v732
    %v918 = vunpack.c.h.b16 %v732
    %v919 = vunpack.c.l.b16 %v733
    %v920 = vunpack.c.h.b16 %v733
    %v921 = vunpack.c.l.b16 %v734
    %v922 = vunpack.c.h.b16 %v734
    %v923 = vunpack.c.l.b16 %v735
    %v924 = vunpack.c.h.b16 %v735
    %v925 = vunpack.c.l.b16 %v736
    %v926 = vunpack.c.h.b16 %v736
    %v927 = vunpack.c.l.b16 %v737
    %v928 = vunpack.c.h.b16 %v737
    %v929 = vunpack.c.l.b16 %v738
    %v930 = vunpack.c.h.b16 %v738
    %v931 = vunpack.c.l.b16 %v739
    %v932 = vunpack.c.h.b16 %v739
    %v933 = vunpack.c.l.b16 %v740
    %v934 = vunpack.c.h.b16 %v740
    %v935 = vunpack.c.l.b16 %v741
    %v936 = vunpack.c.h.b16 %v741
    %v937 = vunpack.c.l.b16 %v742
    %v938 = vunpack.c.h.b16 %v742
    %v939 = vunpack.c.l.b16 %v743
    %v940 = vunpack.c.h.b16 %v743
    %v941 = vunpack.c.l.b16 %v744
    %v942 = vunpack.c.h.b16 %v744
    %v943 = vunpack.c.l.b16 %v745
    %v944 = vunpack.c.h.b16 %v745
    %v945 = vunpack.c.l.b16 %v746
    %v946 = vunpack.c.h.b16 %v746
    %v947 = vunpack.c.l.b16 %v747
    %v948 = vunpack.c.h.b16 %v747
    %v949 = vunpack.c.l.b16 %v748
    %v950 = vunpack.c.h.b16 %v748
    %v951 = vunpack.c.l.b16 %v749
    %v952 = vunpack.c.h.b16 %v749
    %v953 = vunpack.c.l.b16 %v750
    %v954 = vunpack.c.h.b16 %v750
    %v955 = vunpack.c.l.b16 %v751
    %v956 = vunpack.c.h.b16 %v751
    %v957 = vunpack.c.l.b16 %v752
    %v958 = vunpack.c.h.b16 %v752
    %v959 = vunpack.c.l.b16 %v753
    %v960 = vunpack.c.h.b16 %v753
    %v961 = vunpack.c.l.b16 %v754
    %v962 = vunpack.c.h.b16 %v754
    %v963 = vunpack.c.l.b16 %v755
    %v964 = vunpack.c.h.b16 %v755
    %v965 = vunpack.c.l.b16 %v756
    %v966 = vunpack.c.h.b16 %v756
    %v967 = vunpack.c.l.b16 %v757
    %v968 = vunpack.c.h.b16 %v757
    %v969 = vunpack.c.l.b16 %v758
    %v970 = vunpack.c.h.b16 %v758
    %v971 = vunpack.c.l.b16 %v759
    %v972 = vunpack.c.h.b16 %v759
    %v973 = vunpack.c.l.b16 %v760
    %v974 = vunpack.c.h.b16 %v760
    %v975 = vunpack.c.l.b16 %v761
    %v976 = vunpack.c.h.b16 %v761
    %v977 = vunpack.c.l.b16 %v762
    %v978 = vunpack.c.h.b16 %v762
    %v979 = vunpack.c.l.b16 %v763
    %v980 = vunpack.c.h.b16 %v763
    %v981 = vunpack.c.l.b16 %v764
    %v982 = vunpack.c.h.b16 %v764
    %v983 = vunpack.c.l.b16 %v765
    %v984 = vunpack.c.h.b16 %v765
    %v985 = vunpack.c.l.b16 %v766
    %v986 = vunpack.c.h.b16 %v766
    %v987 = vunpack.c.l.b16 %v767
    %v988 = vunpack.c.h.b16 %v767
    %v989 = vunpack.c.l.b16 %v768
    %v990 = vunpack.c.h.b16 %v768
    %v991 = vunpack.c.l.b16 %v769
    %v992 = vunpack.c.h.b16 %v769
    %v993 = vunpack.c.l.b16 %v770
    %v994 = vunpack.c.h.b16 %v770
    %v995 = vunpack.c.l.b16 %v771
    %v996 = vunpack.c.h.b16 %v771
    %v997 = vunpack.c.l.b16 %v772
    %v998 = vunpack.c.h.b16 %v772
    %v999 = vunpack.c.l.b16 %v773
    %v1000 = vunpack.c.h.b16 %v773
    %v1001 = vunpack.c.l.b16 %v774
    %v1002 = vunpack.c.h.b16 %v774
    %v1003 = vunpack.c.l.b16 %v775
    %v1004 = vunpack.c.h.b16 %v775
    %v1005 = vunpack.c.l.b16 %v776
    %v1006 = vunpack.c.h.b16 %v776
    %v1007 = vunpack.c.l.b16 %v777
    %v1008 = vunpack.c.h.b16 %v777
    %v1009 = vunpack.c.l.b16 %v778
    %v1010 = vunpack.c.h.b16 %v778
    %v1011 = vunpack.c.l.b16 %v779
    %v1012 = vunpack.c.h.b16 %v779
    %v1013 = vunpack.c.l.b16 %v780
    %v1014 = vunpack.c.h.b16 %v780
    %v1015 = vunpack.c.l.b16 %v781
    %v1016 = vunpack.c.h.b16 %v781
    %v1017 = vunpack.c.l.b16 %v782
    %v1018 = vunpack.c.h.b16 %v782
    %v1019 = vunpack.c.l.b16 %v783
    %v1020 = vunpack.c.h.b16 %v783
    %v1021 = vunpack.c.l.b16 %v784
    %v1022 = vunpack.c.h.b16 %v784
    %v1023 = vunpack.c.l.b16 %v785
    %v1024 = vunpack.c.h.b16 %v785
    %v1025 = vunpack.c.l.b16 %v786
    %v1026 = vunpack.c.h.b16 %v786
    %v1027 = vunpack.c.l.b16 %v787
    %v1028 = vunpack.c.h.b16 %v787
    %v1029 = vunpack.c.l.b16 %v788
    %v1030 = vunpack.c.h.b16 %v788
    %v1031 = vunpack.c.l.b16 %v789
    %v1032 = vunpack.c.h.b16 %v789
    %v1033 = vunpack.c.l.b16 %v790
    %v1034 = vunpack.c.h.b16 %v790
    %v1035 = vunpack.c.l.b16 %v791
    %v1036 = vunpack.c.h.b16 %v791
    %v1037 = vunpack.c.l.b16 %v792
    %v1038 = vunpack.c.h.b16 %v792
    %v1039 = vunpack.c.l.b16 %v793
    %v1040 = vunpack.c.h.b16 %v793
    %v1041 = vunpack.c.l.b16 %v794
    %v1042 = vunpack.c.h.b16 %v794
    %v1043 = vunpack.c.l.b16 %v795
    %v1044 = vunpack.c.h.b16 %v795
    %v1045 = vunpack.c.l.b16 %v796
    %v1046 = vunpack.c.h.b16 %v796
    %v1047 = vunpack.c.l.b16 %v797
    %v1048 = vunpack.c.h.b16 %v797
    %v1049 = vunpack.c.l.b16 %v798
    %v1050 = vunpack.c.h.b16 %v798
    %v1051 = vunpack.c.l.b16 %v799
    %v1052 = vunpack.c.h.b16 %v799
    %v1053 = vunpack.c.l.b16 %v800
    %v1054 = vunpack.c.h.b16 %v800
    %v1055 = vunpack.c.l.b16 %v801
    %v1056 = vunpack.c.h.b16 %v801
    %v1057 = vunpack.c.l.b16 %v802
    %v1058 = vunpack.c.h.b16 %v802
    %v1059 = vunpack.c.l.b16 %v803
    %v1060 = vunpack.c.h.b16 %v803
    %v1061 = vunpack.c.l.b16 %v804
    %v1062 = vunpack.c.h.b16 %v804
    %v1063 = vunpack.c.l.b16 %v805
    %v1064 = vunpack.c.h.b16 %v805
    %v1065 = vunpack.c.l.b16 %v806
    %v1066 = vunpack.c.h.b16 %v806
    %v1067 = vunpack.c.l.b16 %v807
    %v1068 = vunpack.c.h.b16 %v807
    %v1069 = vunpack.c.l.b16 %v808
    %v1070 = vunpack.c.h.b16 %v808
    %v1071 = vpack.c.b16 %v913, %v911
    %v1072 = vpack.c.b16 %v914, %v912
    %v1073 = vpack.c.b16 %v917, %v915
    %v1074 = vpack.c.b16 %v918, %v916
    %v1075 = vpack.c.b16 %v921, %v919
    %v1076 = vpack.c.b16 %v922, %v920
    %v1077 = vpack.c.b16 %v925, %v923
    %v1078 = vpack.c.b16 %v926, %v924
    %v1079 = vpack.c.b16 %v929, %v927
    %v1080 = vpack.c.b16 %v930, %v928
    %v1081 = vpack.c.b16 %v933, %v931
    %v1082 = vpack.c.b16 %v934, %v932
    %v1083 = vpack.c.b16 %v937, %v935
    %v1084 = vpack.c.b16 %v938, %v936
    %v1085 = vpack.c.b16 %v941, %v939
    %v1086 = vpack.c.b16 %v942, %v940
    %v1087 = vpack.c.b16 %v945, %v943
    %v1088 = vpack.c.b16 %v946, %v944
    %v1089 = vpack.c.b16 %v949, %v947
    %v1090 = vpack.c.b16 %v950, %v948
    %v1091 = vpack.c.b16 %v953, %v951
    %v1092 = vpack.c.b16 %v954, %v952
    %v1093 = vpack.c.b16 %v957, %v955
    %v1094 = vpack.c.b16 %v958, %v956
    %v1095 = vpack.c.b16 %v961, %v959
    %v1096 = vpack.c.b16 %v962, %v960
    %v1097 = vpack.c.b16 %v965, %v963
    %v1098 = vpack.c.b16 %v966, %v964
    %v1099 = vpack.c.b16 %v969, %v967
    %v1100 = vpack.c.b16 %v970, %v968
    %v1101 = vpack.c.b16 %v973, %v971
    %v1102 = vpack.c.b16 %v974, %v972
    %v1103 = vpack.c.b16 %v977, %v975
    %v1104 = vpack.c.b16 %v978, %v976
    %v1105 = vpack.c.b16 %v981, %v979
    %v1106 = vpack.c.b16 %v982, %v980
    %v1107 = vpack.c.b16 %v985, %v983
    %v1108 = vpack.c.b16 %v986, %v984
    %v1109 = vpack.c.b16 %v989, %v987
    %v1110 = vpack.c.b16 %v990, %v988
    %v1111 = vpack.c.b16 %v993, %v991
    %v1112 = vpack.c.b16 %v994, %v992
    %v1113 = vpack.c.b16 %v997, %v995
    %v1114 = vpack.c.b16 %v998, %v996
    %v1115 = vpack.c.b16 %v1001, %v999
    %v1116 = vpack.c.b16 %v1002, %v1000
    %v1117 = vpack.c.b16 %v1005, %v1003
    %v1118 = vpack.c.b16 %v1006, %v1004
    %v1119 = vpack.c.b16 %v1009, %v1007
    %v1120 = vpack.c.b16 %v1010, %v1008
    %v1121 = vpack.c.b16 %v1013, %v1011
    %v1122 = vpack.c.b16 %v1014, %v1012
    %v1123 = vpack.c.b16 %v1017, %v1015
    %v1124 = vpack.c.b16 %v1018, %v1016
    %v1125 = vpack.c.b16 %v1021, %v1019
    %v1126 = vpack.c.b16 %v1022, %v1020
    %v1127 = vpack.c.b16 %v1025, %v1023
    %v1128 = vpack.c.b16 %v1026, %v1024
    %v1129 = vpack.c.b16 %v1029, %v1027
    %v1130 = vpack.c.b16 %v1030, %v1028
    %v1131 = vpack.c.b16 %v1033, %v1031
    %v1132 = vpack.c.b16 %v1034, %v1032
    %v1133 = vpack.c.b16 %v1037, %v1035
    %v1134 = vpack.c.b16 %v1038, %v1036
    %v1135 = vpack.c.b16 %v1041, %v1039
    %v1136 = vpack.c.b16 %v1042, %v1040
    %v1137 = vpack.c.b16 %v1045, %v1043
    %v1138 = vpack.c.b16 %v1046, %v1044
    %v1139 = vpack.c.b16 %v1049, %v1047
    %v1140 = vpack.c.b16 %v1050, %v1048
    %v1141 = vpack.c.b16 %v1053, %v1051
    %v1142 = vpack.c.b16 %v1054, %v1052
    %v1143 = vpack.c.b16 %v1057, %v1055
    %v1144 = vpack.c.b16 %v1058, %v1056
    %v1145 = vpack.c.b16 %v1061, %v1059
    %v1146 = vpack.c.b16 %v1062, %v1060
    %v1147 = vpack.c.b16 %v1065, %v1063
    %v1148 = vpack.c.b16 %v1066, %v1064
    %v1149 = vpack.c.b16 %v1069, %v1067
    %v1150 = vpack.c.b16 %v1070, %v1068
    %1231 = vmatpush.bf16.msra.mxu0 %v1085
    %1232 = vmatpush.bf16.msra.mxu0 %v1083
    %1233 = vmatpush.bf16.msra.mxu0 %v1081
    %1234 = vmatpush.bf16.msra.mxu0 %v1079
    %1235 = vmatpush.bf16.msra.mxu0 %v1077
    %1236 = vmatpush.bf16.msra.mxu0 %v1075
    %1237 = vmatpush.bf16.msra.mxu0 %v1073
    %1238 = vmatpush.bf16.msra.mxu0 %v1071
    %1239 = vmatmul.bf16.gmra.mxu0 %v809
    %v1240 = vpop.f32.mrf.mxu0
    %v1241 = vadd.f32 0.0, %v1240
    %v1242 = vpop.f32.mrf.mxu0
    %v1243 = vadd.f32 0.0, %v1242
    %1244 = vmatmul.bf16.gmra.mxu0 %v811
    %v1245 = vpop.f32.mrf.mxu0
    %v1246 = vadd.f32 0.0, %v1245
    %v1247 = vpop.f32.mrf.mxu0
    %v1248 = vadd.f32 0.0, %v1247
    %1249 = vmatmul.bf16.gmra.mxu0 %v813
    %v1250 = vpop.f32.mrf.mxu0
    %v1251 = vadd.f32 0.0, %v1250
    %v1252 = vpop.f32.mrf.mxu0
    %v1253 = vadd.f32 0.0, %v1252
    %1254 = vmatmul.bf16.gmra.mxu0 %v815
    %v1255 = vpop.f32.mrf.mxu0
    %v1256 = vadd.f32 0.0, %v1255
    %v1257 = vpop.f32.mrf.mxu0
    %v1258 = vadd.f32 0.0, %v1257
    %1259 = vdwg.mxu0
    %1260 = vmatpush.bf16.msra.mxu0 %v1101
    %1261 = vmatpush.bf16.msra.mxu0 %v1099
    %1262 = vmatpush.bf16.msra.mxu0 %v1097
    %1263 = vmatpush.bf16.msra.mxu0 %v1095
    %1264 = vmatpush.bf16.msra.mxu0 %v1093
    %1265 = vmatpush.bf16.msra.mxu0 %v1091
    %1266 = vmatpush.bf16.msra.mxu0 %v1089
    %1267 = vmatpush.bf16.msra.mxu0 %v1087
    %1268 = vmatmul.bf16.gmra.mxu0 %v810
    %v1269 = vpop.f32.mrf.mxu0
    %v1270 = vadd.f32 %v1241, %v1269
    %v1271 = vpop.f32.mrf.mxu0
    %v1272 = vadd.f32 %v1243, %v1271
    %1273 = vmatmul.bf16.gmra.mxu0 %v812
    %v1274 = vpop.f32.mrf.mxu0
    %v1275 = vadd.f32 %v1246, %v1274
    %v1276 = vpop.f32.mrf.mxu0
    %v1277 = vadd.f32 %v1248, %v1276
    %1278 = vmatmul.bf16.gmra.mxu0 %v814
    %v1279 = vpop.f32.mrf.mxu0
    %v1280 = vadd.f32 %v1251, %v1279
    %v1281 = vpop.f32.mrf.mxu0
    %v1282 = vadd.f32 %v1253, %v1281
    %1283 = vmatmul.bf16.gmra.mxu0 %v816
    %v1284 = vpop.f32.mrf.mxu0
    %v1285 = vadd.f32 %v1256, %v1284
    %v1286 = vpop.f32.mrf.mxu0
    %v1287 = vadd.f32 %v1258, %v1286
    %1288 = vdwg.mxu0
    %1289 = vmatpush.bf16.msra.mxu0 %v1117
    %1290 = vmatpush.bf16.msra.mxu0 %v1115
    %1291 = vmatpush.bf16.msra.mxu0 %v1113
    %1292 = vmatpush.bf16.msra.mxu0 %v1111
    %1293 = vmatpush.bf16.msra.mxu0 %v1109
    %1294 = vmatpush.bf16.msra.mxu0 %v1107
    %1295 = vmatpush.bf16.msra.mxu0 %v1105
    %1296 = vmatpush.bf16.msra.mxu0 %v1103
    %1297 = vmatmul.bf16.gmra.mxu0 %v811
    %v1298 = vpop.f32.mrf.mxu0
    %v1299 = vadd.f32 %v1270, %v1298
    %v1300 = vpop.f32.mrf.mxu0
    %v1301 = vadd.f32 %v1272, %v1300
    %1302 = vmatmul.bf16.gmra.mxu0 %v813
    %v1303 = vpop.f32.mrf.mxu0
    %v1304 = vadd.f32 %v1275, %v1303
    %v1305 = vpop.f32.mrf.mxu0
    %v1306 = vadd.f32 %v1277, %v1305
    %1307 = vmatmul.bf16.gmra.mxu0 %v815
    %v1308 = vpop.f32.mrf.mxu0
    %v1309 = vadd.f32 %v1280, %v1308
    %v1310 = vpop.f32.mrf.mxu0
    %v1311 = vadd.f32 %v1282, %v1310
    %1312 = vmatmul.bf16.gmra.mxu0 %v817
    %v1313 = vpop.f32.mrf.mxu0
    %v1314 = vadd.f32 %v1285, %v1313
    %v1315 = vpop.f32.mrf.mxu0
    %v1316 = vadd.f32 %v1287, %v1315
    %1317 = vdwg.mxu0
    %1318 = vmatpush.bf16.msra.mxu0 %v1133
    %1319 = vmatpush.bf16.msra.mxu0 %v1131
    %1320 = vmatpush.bf16.msra.mxu0 %v1129
    %1321 = vmatpush.bf16.msra.mxu0 %v1127
    %1322 = vmatpush.bf16.msra.mxu0 %v1125
    %1323 = vmatpush.bf16.msra.mxu0 %v1123
    %1324 = vmatpush.bf16.msra.mxu0 %v1121
    %1325 = vmatpush.bf16.msra.mxu0 %v1119
    %1326 = vmatmul.bf16.gmra.mxu0 %v812
    %v1327 = vpop.f32.mrf.mxu0
    %v1328 = vadd.f32 %v1299, %v1327
    %v1329 = vpop.f32.mrf.mxu0
    %v1330 = vadd.f32 %v1301, %v1329
    %1331 = vmatmul.bf16.gmra.mxu0 %v814
    %v1332 = vpop.f32.mrf.mxu0
    %v1333 = vadd.f32 %v1304, %v1332
    %v1334 = vpop.f32.mrf.mxu0
    %v1335 = vadd.f32 %v1306, %v1334
    %1336 = vmatmul.bf16.gmra.mxu0 %v816
    %v1337 = vpop.f32.mrf.mxu0
    %v1338 = vadd.f32 %v1309, %v1337
    %v1339 = vpop.f32.mrf.mxu0
    %v1340 = vadd.f32 %v1311, %v1339
    %1341 = vmatmul.bf16.gmra.mxu0 %v818
    %v1342 = vpop.f32.mrf.mxu0
    %v1343 = vadd.f32 %v1314, %v1342
    %v1344 = vpop.f32.mrf.mxu0
    %v1345 = vadd.f32 %v1316, %v1344
    %1346 = vdwg.mxu0
    %1347 = vmatpush.bf16.msra.mxu0 %v1149
    %1348 = vmatpush.bf16.msra.mxu0 %v1147
    %1349 = vmatpush.bf16.msra.mxu0 %v1145
    %1350 = vmatpush.bf16.msra.mxu0 %v1143
    %1351 = vmatpush.bf16.msra.mxu0 %v1141
    %1352 = vmatpush.bf16.msra.mxu0 %v1139
    %1353 = vmatpush.bf16.msra.mxu0 %v1137
    %1354 = vmatpush.bf16.msra.mxu0 %v1135
    %1355 = vmatmul.bf16.gmra.mxu0 %v813
    %v1356 = vpop.f32.mrf.mxu0
    %v1357 = vadd.f32 %v1328, %v1356
    %v1358 = vpop.f32.mrf.mxu0
    %v1359 = vadd.f32 %v1330, %v1358
    %1360 = vmatmul.bf16.gmra.mxu0 %v815
    %v1361 = vpop.f32.mrf.mxu0
    %v1362 = vadd.f32 %v1333, %v1361
    %v1363 = vpop.f32.mrf.mxu0
    %v1364 = vadd.f32 %v1335, %v1363
    %1365 = vmatmul.bf16.gmra.mxu0 %v817
    %v1366 = vpop.f32.mrf.mxu0
    %v1367 = vadd.f32 %v1338, %v1366
    %v1368 = vpop.f32.mrf.mxu0
    %v1369 = vadd.f32 %v1340, %v1368
    %1370 = vmatmul.bf16.gmra.mxu0 %v819
    %v1371 = vpop.f32.mrf.mxu0
    %v1372 = vadd.f32 %v1343, %v1371
    %v1373 = vpop.f32.mrf.mxu0
    %v1374 = vadd.f32 %v1345, %v1373
    %1375 = vdwg.mxu0
    %1376 = vmatpush.bf16.msra.mxu0 %v1086
    %1377 = vmatpush.bf16.msra.mxu0 %v1084
    %1378 = vmatpush.bf16.msra.mxu0 %v1082
    %1379 = vmatpush.bf16.msra.mxu0 %v1080
    %1380 = vmatpush.bf16.msra.mxu0 %v1078
    %1381 = vmatpush.bf16.msra.mxu0 %v1076
    %1382 = vmatpush.bf16.msra.mxu0 %v1074
    %1383 = vmatpush.bf16.msra.mxu0 %v1072
    %1384 = vmatmul.bf16.gmra.mxu0 %v809
    %v1385 = vpop.f32.mrf.mxu0
    %v1386 = vadd.f32 0.0, %v1385
    %v1387 = vpop.f32.mrf.mxu0
    %v1388 = vadd.f32 0.0, %v1387
    %1389 = vmatmul.bf16.gmra.mxu0 %v811
    %v1390 = vpop.f32.mrf.mxu0
    %v1391 = vadd.f32 0.0, %v1390
    %v1392 = vpop.f32.mrf.mxu0
    %v1393 = vadd.f32 0.0, %v1392
    %1394 = vmatmul.bf16.gmra.mxu0 %v813
    %v1395 = vpop.f32.mrf.mxu0
    %v1396 = vadd.f32 0.0, %v1395
    %v1397 = vpop.f32.mrf.mxu0
    %v1398 = vadd.f32 0.0, %v1397
    %1399 = vmatmul.bf16.gmra.mxu0 %v815
    %v1400 = vpop.f32.mrf.mxu0
    %v1401 = vadd.f32 0.0, %v1400
    %v1402 = vpop.f32.mrf.mxu0
    %v1403 = vadd.f32 0.0, %v1402
    %1404 = vdwg.mxu0
    %1405 = vmatpush.bf16.msra.mxu0 %v1102
    %1406 = vmatpush.bf16.msra.mxu0 %v1100
    %1407 = vmatpush.bf16.msra.mxu0 %v1098
    %1408 = vmatpush.bf16.msra.mxu0 %v1096
    %1409 = vmatpush.bf16.msra.mxu0 %v1094
    %1410 = vmatpush.bf16.msra.mxu0 %v1092
    %1411 = vmatpush.bf16.msra.mxu0 %v1090
    %1412 = vmatpush.bf16.msra.mxu0 %v1088
    %1413 = vmatmul.bf16.gmra.mxu0 %v810
    %v1414 = vpop.f32.mrf.mxu0
    %v1415 = vadd.f32 %v1386, %v1414
    %v1416 = vpop.f32.mrf.mxu0
    %v1417 = vadd.f32 %v1388, %v1416
    %1418 = vmatmul.bf16.gmra.mxu0 %v812
    %v1419 = vpop.f32.mrf.mxu0
    %v1420 = vadd.f32 %v1391, %v1419
    %v1421 = vpop.f32.mrf.mxu0
    %v1422 = vadd.f32 %v1393, %v1421
    %1423 = vmatmul.bf16.gmra.mxu0 %v814
    %v1424 = vpop.f32.mrf.mxu0
    %v1425 = vadd.f32 %v1396, %v1424
    %v1426 = vpop.f32.mrf.mxu0
    %v1427 = vadd.f32 %v1398, %v1426
    %1428 = vmatmul.bf16.gmra.mxu0 %v816
    %v1429 = vpop.f32.mrf.mxu0
    %v1430 = vadd.f32 %v1401, %v1429
    %v1431 = vpop.f32.mrf.mxu0
    %v1432 = vadd.f32 %v1403, %v1431
    %1433 = vdwg.mxu0
    %1434 = vmatpush.bf16.msra.mxu0 %v1118
    %1435 = vmatpush.bf16.msra.mxu0 %v1116
    %1436 = vmatpush.bf16.msra.mxu0 %v1114
    %1437 = vmatpush.bf16.msra.mxu0 %v1112
    %1438 = vmatpush.bf16.msra.mxu0 %v1110
    %1439 = vmatpush.bf16.msra.mxu0 %v1108
    %1440 = vmatpush.bf16.msra.mxu0 %v1106
    %1441 = vmatpush.bf16.msra.mxu0 %v1104
    %1442 = vmatmul.bf16.gmra.mxu0 %v811
    %v1443 = vpop.f32.mrf.mxu0
    %v1444 = vadd.f32 %v1415, %v1443
    %v1445 = vpop.f32.mrf.mxu0
    %v1446 = vadd.f32 %v1417, %v1445
    %1447 = vmatmul.bf16.gmra.mxu0 %v813
    %v1448 = vpop.f32.mrf.mxu0
    %v1449 = vadd.f32 %v1420, %v1448
    %v1450 = vpop.f32.mrf.mxu0
    %v1451 = vadd.f32 %v1422, %v1450
    %1452 = vmatmul.bf16.gmra.mxu0 %v815
    %v1453 = vpop.f32.mrf.mxu0
    %v1454 = vadd.f32 %v1425, %v1453
    %v1455 = vpop.f32.mrf.mxu0
    %v1456 = vadd.f32 %v1427, %v1455
    %1457 = vmatmul.bf16.gmra.mxu0 %v817
    %v1458 = vpop.f32.mrf.mxu0
    %v1459 = vadd.f32 %v1430, %v1458
    %v1460 = vpop.f32.mrf.mxu0
    %v1461 = vadd.f32 %v1432, %v1460
    %1462 = vdwg.mxu0
    %1463 = vmatpush.bf16.msra.mxu0 %v1134
    %1464 = vmatpush.bf16.msra.mxu0 %v1132
    %1465 = vmatpush.bf16.msra.mxu0 %v1130
    %1466 = vmatpush.bf16.msra.mxu0 %v1128
    %1467 = vmatpush.bf16.msra.mxu0 %v1126
    %1468 = vmatpush.bf16.msra.mxu0 %v1124
    %1469 = vmatpush.bf16.msra.mxu0 %v1122
    %1470 = vmatpush.bf16.msra.mxu0 %v1120
    %1471 = vmatmul.bf16.gmra.mxu0 %v812
    %v1472 = vpop.f32.mrf.mxu0
    %v1473 = vadd.f32 %v1444, %v1472
    %v1474 = vpop.f32.mrf.mxu0
    %v1475 = vadd.f32 %v1446, %v1474
    %1476 = vmatmul.bf16.gmra.mxu0 %v814
    %v1477 = vpop.f32.mrf.mxu0
    %v1478 = vadd.f32 %v1449, %v1477
    %v1479 = vpop.f32.mrf.mxu0
    %v1480 = vadd.f32 %v1451, %v1479
    %1481 = vmatmul.bf16.gmra.mxu0 %v816
    %v1482 = vpop.f32.mrf.mxu0
    %v1483 = vadd.f32 %v1454, %v1482
    %v1484 = vpop.f32.mrf.mxu0
    %v1485 = vadd.f32 %v1456, %v1484
    %1486 = vmatmul.bf16.gmra.mxu0 %v818
    %v1487 = vpop.f32.mrf.mxu0
    %v1488 = vadd.f32 %v1459, %v1487
    %v1489 = vpop.f32.mrf.mxu0
    %v1490 = vadd.f32 %v1461, %v1489
    %1491 = vdwg.mxu0
    %1492 = vmatpush.bf16.msra.mxu0 %v1150
    %1493 = vmatpush.bf16.msra.mxu0 %v1148
    %1494 = vmatpush.bf16.msra.mxu0 %v1146
    %1495 = vmatpush.bf16.msra.mxu0 %v1144
    %1496 = vmatpush.bf16.msra.mxu0 %v1142
    %1497 = vmatpush.bf16.msra.mxu0 %v1140
    %1498 = vmatpush.bf16.msra.mxu0 %v1138
    %1499 = vmatpush.bf16.msra.mxu0 %v1136
    %1500 = vmatmul.bf16.gmra.mxu0 %v813
    %v1501 = vpop.f32.mrf.mxu0
    %v1502 = vadd.f32 %v1473, %v1501
    %v1503 = vpop.f32.mrf.mxu0
    %v1504 = vadd.f32 %v1475, %v1503
    %1505 = vmatmul.bf16.gmra.mxu0 %v815
    %v1506 = vpop.f32.mrf.mxu0
    %v1507 = vadd.f32 %v1478, %v1506
    %v1508 = vpop.f32.mrf.mxu0
    %v1509 = vadd.f32 %v1480, %v1508
    %1510 = vmatmul.bf16.gmra.mxu0 %v817
    %v1511 = vpop.f32.mrf.mxu0
    %v1512 = vadd.f32 %v1483, %v1511
    %v1513 = vpop.f32.mrf.mxu0
    %v1514 = vadd.f32 %v1485, %v1513
    %1515 = vmatmul.bf16.gmra.mxu0 %v819
    %v1516 = vpop.f32.mrf.mxu0
    %v1517 = vadd.f32 %v1488, %v1516
    %v1518 = vpop.f32.mrf.mxu0
    %v1519 = vadd.f32 %v1490, %v1518
    %1520 = vdwg.mxu0
    %v1521 = vmax.f32 %v1357, %v1502
    %v1522 = vmax.f32 %v1359, %v1504
    %v1523 = vmax.f32 %v1362, %v1507
    %v1524 = vmax.f32 %v1364, %v1509
    %v1525 = vmax.f32 %v1367, %v1512
    %v1526 = vmax.f32 %v1369, %v1514
    %v1527 = vmax.f32 %v1372, %v1517
    %v1528 = vmax.f32 %v1374, %v1519
    %v1529 = vmax.f32 %v1521, %v1522
    %v1530 = vmax.f32 %v1523, %v1524
    %v1531 = vmax.f32 %v1525, %v1526
    %v1532 = vmax.f32 %v1527, %v1528
    %v1533 = vld [vmem:[%s4] sm:$0x1]
    %v1535 = vperm.slane %v1533, 0
    %v1537 = vadd.f32 %v1529, %v1535
    %v1538 = vadd.f32 %v1530, %v1535
    %v1539 = vadd.f32 %v1531, %v1535
    %v1540 = vadd.f32 %v1532, %v1535
    %v1541 = vmax.f32 %v1537, 0.0
    %v1542 = vmax.f32 %v1538, 0.0
    %v1543 = vmax.f32 %v1539, 0.0
    %v1544 = vmax.f32 %v1540, 0.0
    %v1545 = vpack.c.bf16 %v1541, %v1541
    %v1546 = vpack.c.bf16 %v1542, %v1542
    %v1547 = vpack.c.bf16 %v1543, %v1543
    %v1548 = vpack.c.bf16 %v1544, %v1544
    %v1549 = vld [vmem:[#allocation4] sm:$0xf]
    %v1550 = vld [vmem:[#allocation4 + $0x4] sm:$0xf]
    %v1551 = vld [vmem:[#allocation4 + $0x8] sm:$0xf]
    %v1552 = vld [vmem:[#allocation4 + $0xc] sm:$0xf]
    %v1553 = vld [vmem:[#allocation4 + $0x10] sm:$0xf]
    %v1554 = vld [vmem:[#allocation4 + $0x14] sm:$0xf]
    %v1555 = vld [vmem:[#allocation4 + $0x18] sm:$0xf]
    %v1556 = vld [vmem:[#allocation4 + $0x1c] sm:$0xf]
    %v1557 = vld [vmem:[#allocation4 + $0x20] sm:$0xf]
    %v1558 = vld [vmem:[#allocation4 + $0x24] sm:$0xf]
    %v1559 = vld [vmem:[#allocation4 + $0x28] sm:$0xf]
    %v1560 = vld [vmem:[#allocation4 + $0x2c] sm:$0xf]
    %v1561 = vld [vmem:[#allocation4 + $0x30] sm:$0xf]
    %v1562 = vld [vmem:[#allocation4 + $0x34] sm:$0xf]
    %v1563 = vld [vmem:[#allocation4 + $0x38] sm:$0xf]
    %v1564 = vld [vmem:[#allocation4 + $0x3c] sm:$0xf]
    %v1565 = vld [vmem:[#allocation4 + $0x40] sm:$0xf]
    %v1566 = vld [vmem:[#allocation4 + $0x44] sm:$0xf]
    %v1567 = vld [vmem:[#allocation4 + $0x48] sm:$0xf]
    %v1568 = vld [vmem:[#allocation4 + $0x4c] sm:$0xf]
    %v1569 = vld [vmem:[#allocation4 + $0x50] sm:$0xf]
    %v1570 = vld [vmem:[#allocation4 + $0x54] sm:$0xf]
    %v1571 = vld [vmem:[#allocation4 + $0x58] sm:$0xf]
    %v1572 = vld [vmem:[#allocation4 + $0x5c] sm:$0xf]
    %v1573 = vld [vmem:[#allocation4 + $0x60] sm:$0xf]
    %v1574 = vld [vmem:[#allocation4 + $0x64] sm:$0xf]
    %v1575 = vld [vmem:[#allocation4 + $0x68] sm:$0xf]
    %v1576 = vld [vmem:[#allocation4 + $0x6c] sm:$0xf]
    %v1577 = vld [vmem:[#allocation4 + $0x70] sm:$0xf]
    %v1578 = vld [vmem:[#allocation4 + $0x74] sm:$0xf]
    %v1579 = vld [vmem:[#allocation4 + $0x78] sm:$0xf]
    %v1580 = vld [vmem:[#allocation4 + $0x7c] sm:$0xf]
    %v1581 = vld [vmem:[#allocation4 + $0x80] sm:$0xf]
    %v1582 = vld [vmem:[#allocation4 + $0x84] sm:$0xf]
    %v1583 = vld [vmem:[#allocation4 + $0x88] sm:$0xf]
    %v1584 = vld [vmem:[#allocation4 + $0x8c] sm:$0xf]
    %v1585 = vld [vmem:[#allocation4 + $0x90] sm:$0xf]
    %v1586 = vld [vmem:[#allocation4 + $0x94] sm:$0xf]
    %v1587 = vld [vmem:[#allocation4 + $0x98] sm:$0xf]
    %v1588 = vld [vmem:[#allocation4 + $0x9c] sm:$0xf]
    %v1589 = vld [vmem:[#allocation4 + $0xa0] sm:$0xf]
    %v1590 = vld [vmem:[#allocation4 + $0xa4] sm:$0xf]
    %v1591 = vld [vmem:[#allocation4 + $0xa8] sm:$0xf]
    %v1592 = vld [vmem:[#allocation4 + $0xac] sm:$0xf]
    %v1593 = vld [vmem:[#allocation4 + $0xb0] sm:$0xf]
    %v1594 = vld [vmem:[#allocation4 + $0xb4] sm:$0xf]
    %v1595 = vld [vmem:[#allocation4 + $0xb8] sm:$0xf]
    %v1596 = vld [vmem:[#allocation4 + $0xbc] sm:$0xf]
    %v1597 = vld [vmem:[#allocation4 + $0xc0] sm:$0xf]
    %v1598 = vld [vmem:[#allocation4 + $0xc4] sm:$0xf]
    %v1599 = vld [vmem:[#allocation4 + $0xc8] sm:$0xf]
    %v1600 = vld [vmem:[#allocation4 + $0xcc] sm:$0xf]
    %v1601 = vld [vmem:[#allocation4 + $0xd0] sm:$0xf]
    %v1602 = vld [vmem:[#allocation4 + $0xd4] sm:$0xf]
    %v1603 = vld [vmem:[#allocation4 + $0xd8] sm:$0xf]
    %v1604 = vld [vmem:[#allocation4 + $0xdc] sm:$0xf]
    %v1605 = vld [vmem:[#allocation4 + $0xe0] sm:$0xf]
    %v1606 = vld [vmem:[#allocation4 + $0xe4] sm:$0xf]
    %v1607 = vld [vmem:[#allocation4 + $0xe8] sm:$0xf]
    %v1608 = vld [vmem:[#allocation4 + $0xec] sm:$0xf]
    %v1609 = vld [vmem:[#allocation4 + $0xf0] sm:$0xf]
    %v1610 = vld [vmem:[#allocation4 + $0xf4] sm:$0xf]
    %v1611 = vld [vmem:[#allocation4 + $0xf8] sm:$0xf]
    %v1612 = vld [vmem:[#allocation4 + $0xfc] sm:$0xf]
    %v1613 = vld [vmem:[%s6] sm:$0x1]
    %v1615 = vperm.slane %v1613, 0
    %v1681 = vunpack.c.l.b16 %v1549
    %v1682 = vunpack.c.l.b16 %v1550
    %v1683 = vunpack.c.l.b16 %v1551
    %v1684 = vunpack.c.l.b16 %v1552
    %v1685 = vunpack.c.l.b16 %v1553
    %v1686 = vunpack.c.l.b16 %v1554
    %v1687 = vunpack.c.l.b16 %v1555
    %v1688 = vunpack.c.l.b16 %v1556
    %v1689 = vunpack.c.l.b16 %v1557
    %v1690 = vunpack.c.l.b16 %v1558
    %v1691 = vunpack.c.l.b16 %v1559
    %v1692 = vunpack.c.l.b16 %v1560
    %v1693 = vunpack.c.l.b16 %v1561
    %v1694 = vunpack.c.l.b16 %v1562
    %v1695 = vunpack.c.l.b16 %v1563
    %v1696 = vunpack.c.l.b16 %v1564
    %v1697 = vunpack.c.l.b16 %v1565
    %v1698 = vunpack.c.l.b16 %v1566
    %v1699 = vunpack.c.l.b16 %v1567
    %v1700 = vunpack.c.l.b16 %v1568
    %v1701 = vunpack.c.l.b16 %v1569
    %v1702 = vunpack.c.l.b16 %v1570
    %v1703 = vunpack.c.l.b16 %v1571
    %v1704 = vunpack.c.l.b16 %v1572
    %v1705 = vunpack.c.l.b16 %v1573
    %v1706 = vunpack.c.l.b16 %v1574
    %v1707 = vunpack.c.l.b16 %v1575
    %v1708 = vunpack.c.l.b16 %v1576
    %v1709 = vunpack.c.l.b16 %v1577
    %v1710 = vunpack.c.l.b16 %v1578
    %v1711 = vunpack.c.l.b16 %v1579
    %v1712 = vunpack.c.l.b16 %v1580
    %v1713 = vunpack.c.l.b16 %v1581
    %v1714 = vunpack.c.l.b16 %v1582
    %v1715 = vunpack.c.l.b16 %v1583
    %v1716 = vunpack.c.l.b16 %v1584
    %v1717 = vunpack.c.l.b16 %v1585
    %v1718 = vunpack.c.l.b16 %v1586
    %v1719 = vunpack.c.l.b16 %v1587
    %v1720 = vunpack.c.l.b16 %v1588
    %v1721 = vunpack.c.l.b16 %v1589
    %v1722 = vunpack.c.l.b16 %v1590
    %v1723 = vunpack.c.l.b16 %v1591
    %v1724 = vunpack.c.l.b16 %v1592
    %v1725 = vunpack.c.l.b16 %v1593
    %v1726 = vunpack.c.l.b16 %v1594
    %v1727 = vunpack.c.l.b16 %v1595
    %v1728 = vunpack.c.l.b16 %v1596
    %v1729 = vunpack.c.l.b16 %v1597
    %v1730 = vunpack.c.l.b16 %v1598
    %v1731 = vunpack.c.l.b16 %v1599
    %v1732 = vunpack.c.l.b16 %v1600
    %v1733 = vunpack.c.l.b16 %v1601
    %v1734 = vunpack.c.l.b16 %v1602
    %v1735 = vunpack.c.l.b16 %v1603
    %v1736 = vunpack.c.l.b16 %v1604
    %v1737 = vunpack.c.l.b16 %v1605
    %v1738 = vunpack.c.l.b16 %v1606
    %v1739 = vunpack.c.l.b16 %v1607
    %v1740 = vunpack.c.l.b16 %v1608
    %v1741 = vunpack.c.l.b16 %v1609
    %v1742 = vunpack.c.l.b16 %v1610
    %v1743 = vunpack.c.l.b16 %v1611
    %v1744 = vunpack.c.l.b16 %v1612
    %v1745 = vpack.c.b16 %v1682, %v1681
    %v1746 = vpack.c.b16 %v1684, %v1683
    %v1747 = vpack.c.b16 %v1686, %v1685
    %v1748 = vpack.c.b16 %v1688, %v1687
    %v1749 = vpack.c.b16 %v1690, %v1689
    %v1750 = vpack.c.b16 %v1692, %v1691
    %v1751 = vpack.c.b16 %v1694, %v1693
    %v1752 = vpack.c.b16 %v1696, %v1695
    %v1753 = vpack.c.b16 %v1698, %v1697
    %v1754 = vpack.c.b16 %v1700, %v1699
    %v1755 = vpack.c.b16 %v1702, %v1701
    %v1756 = vpack.c.b16 %v1704, %v1703
    %v1757 = vpack.c.b16 %v1706, %v1705
    %v1758 = vpack.c.b16 %v1708, %v1707
    %v1759 = vpack.c.b16 %v1710, %v1709
    %v1760 = vpack.c.b16 %v1712, %v1711
    %v1761 = vpack.c.b16 %v1714, %v1713
    %v1762 = vpack.c.b16 %v1716, %v1715
    %v1763 = vpack.c.b16 %v1718, %v1717
    %v1764 = vpack.c.b16 %v1720, %v1719
    %v1765 = vpack.c.b16 %v1722, %v1721
    %v1766 = vpack.c.b16 %v1724, %v1723
    %v1767 = vpack.c.b16 %v1726, %v1725
    %v1768 = vpack.c.b16 %v1728, %v1727
    %v1769 = vpack.c.b16 %v1730, %v1729
    %v1770 = vpack.c.b16 %v1732, %v1731
    %v1771 = vpack.c.b16 %v1734, %v1733
    %v1772 = vpack.c.b16 %v1736, %v1735
    %v1773 = vpack.c.b16 %v1738, %v1737
    %v1774 = vpack.c.b16 %v1740, %v1739
    %v1775 = vpack.c.b16 %v1742, %v1741
    %v1776 = vpack.c.b16 %v1744, %v1743
    %1809 = vmatpush.bf16.msra.mxu0 %v1752
    %1810 = vmatpush.bf16.msra.mxu0 %v1751
    %1811 = vmatpush.bf16.msra.mxu0 %v1750
    %1812 = vmatpush.bf16.msra.mxu0 %v1749
    %1813 = vmatpush.bf16.msra.mxu0 %v1748
    %1814 = vmatpush.bf16.msra.mxu0 %v1747
    %1815 = vmatpush.bf16.msra.mxu0 %v1746
    %1816 = vmatpush.bf16.msra.mxu0 %v1745
    %1817 = vmatmul.bf16.gmra.mxu0 %v1545
    %v1818 = vpop.f32.mrf.mxu0
    %v1819 = vadd.f32 %v1615, %v1818
    %v1820 = vpop.f32.mrf.mxu0
    %1821 = vdwg.mxu0
    %1822 = vmatpush.bf16.msra.mxu0 %v1760
    %1823 = vmatpush.bf16.msra.mxu0 %v1759
    %1824 = vmatpush.bf16.msra.mxu0 %v1758
    %1825 = vmatpush.bf16.msra.mxu0 %v1757
    %1826 = vmatpush.bf16.msra.mxu0 %v1756
    %1827 = vmatpush.bf16.msra.mxu0 %v1755
    %1828 = vmatpush.bf16.msra.mxu0 %v1754
    %1829 = vmatpush.bf16.msra.mxu0 %v1753
    %1830 = vmatmul.bf16.gmra.mxu0 %v1546
    %v1831 = vpop.f32.mrf.mxu0
    %v1832 = vadd.f32 %v1819, %v1831
    %v1833 = vpop.f32.mrf.mxu0
    %1834 = vdwg.mxu0
    %1835 = vmatpush.bf16.msra.mxu0 %v1768
    %1836 = vmatpush.bf16.msra.mxu0 %v1767
    %1837 = vmatpush.bf16.msra.mxu0 %v1766
    %1838 = vmatpush.bf16.msra.mxu0 %v1765
    %1839 = vmatpush.bf16.msra.mxu0 %v1764
    %1840 = vmatpush.bf16.msra.mxu0 %v1763
    %1841 = vmatpush.bf16.msra.mxu0 %v1762
    %1842 = vmatpush.bf16.msra.mxu0 %v1761
    %1843 = vmatmul.bf16.gmra.mxu0 %v1547
    %v1844 = vpop.f32.mrf.mxu0
    %v1845 = vadd.f32 %v1832, %v1844
    %v1846 = vpop.f32.mrf.mxu0
    %1847 = vdwg.mxu0
    %1848 = vmatpush.bf16.msra.mxu0 %v1776
    %1849 = vmatpush.bf16.msra.mxu0 %v1775
    %1850 = vmatpush.bf16.msra.mxu0 %v1774
    %1851 = vmatpush.bf16.msra.mxu0 %v1773
    %1852 = vmatpush.bf16.msra.mxu0 %v1772
    %1853 = vmatpush.bf16.msra.mxu0 %v1771
    %1854 = vmatpush.bf16.msra.mxu0 %v1770
    %1855 = vmatpush.bf16.msra.mxu0 %v1769
    %1856 = vmatmul.bf16.gmra.mxu0 %v1548
    %v1857 = vpop.f32.mrf.mxu0
    %v1858 = vadd.f32 %v1845, %v1857
    %v1859 = vpop.f32.mrf.mxu0
    %1860 = vdwg.mxu0
    %v1861 = vmax.f32 %v1858, 0.0
    %v1862 = vpack.c.bf16 %v1861, %v1861
    %v1863 = vld [vmem:[%s7] sm:$0xf]
    %v1864 = vld [vmem:[%s7 + $0x4] sm:$0xf]
    %v1865 = vld [vmem:[%s7 + $0x8] sm:$0xf]
    %v1866 = vld [vmem:[%s7 + $0xc] sm:$0xf]
    %v1867 = vld [vmem:[%s7 + $0x10] sm:$0xf]
    %v1868 = vld [vmem:[%s7 + $0x14] sm:$0xf]
    %v1869 = vld [vmem:[%s7 + $0x18] sm:$0xf]
    %v1870 = vld [vmem:[%s7 + $0x1c] sm:$0xf]
    %v1871 = vld [vmem:[%s7 + $0x20] sm:$0xf]
    %v1872 = vld [vmem:[%s7 + $0x24] sm:$0xf]
    %v1873 = vld [vmem:[%s7 + $0x28] sm:$0xf]
    %v1874 = vld [vmem:[%s7 + $0x2c] sm:$0xf]
    %v1875 = vld [vmem:[%s7 + $0x30] sm:$0xf]
    %v1876 = vld [vmem:[%s7 + $0x34] sm:$0xf]
    %v1877 = vld [vmem:[%s7 + $0x38] sm:$0xf]
    %v1878 = vld [vmem:[%s7 + $0x3c] sm:$0xf]
    %v1879 = vld [vmem:[%s8] sm:$0x1]
    %v1881 = vperm.slane %v1879, 0
    %v1899 = vunpack.c.l.b16 %v1863
    %v1900 = vunpack.c.l.b16 %v1864
    %v1901 = vunpack.c.l.b16 %v1865
    %v1902 = vunpack.c.l.b16 %v1866
    %v1903 = vunpack.c.l.b16 %v1867
    %v1904 = vunpack.c.l.b16 %v1868
    %v1905 = vunpack.c.l.b16 %v1869
    %v1906 = vunpack.c.l.b16 %v1870
    %v1907 = vunpack.c.l.b16 %v1871
    %v1908 = vunpack.c.l.b16 %v1872
    %v1909 = vunpack.c.l.b16 %v1873
    %v1910 = vunpack.c.l.b16 %v1874
    %v1911 = vunpack.c.l.b16 %v1875
    %v1912 = vunpack.c.l.b16 %v1876
    %v1913 = vunpack.c.l.b16 %v1877
    %v1914 = vunpack.c.l.b16 %v1878
    %v1915 = vpack.c.b16 %v1900, %v1899
    %v1916 = vpack.c.b16 %v1902, %v1901
    %v1917 = vpack.c.b16 %v1904, %v1903
    %v1918 = vpack.c.b16 %v1906, %v1905
    %v1919 = vpack.c.b16 %v1908, %v1907
    %v1920 = vpack.c.b16 %v1910, %v1909
    %v1921 = vpack.c.b16 %v1912, %v1911
    %v1922 = vpack.c.b16 %v1914, %v1913
    %1931 = vmatpush.bf16.msra.mxu0 %v1922
    %1932 = vmatpush.bf16.msra.mxu0 %v1921
    %1933 = vmatpush.bf16.msra.mxu0 %v1920
    %1934 = vmatpush.bf16.msra.mxu0 %v1919
    %1935 = vmatpush.bf16.msra.mxu0 %v1918
    %1936 = vmatpush.bf16.msra.mxu0 %v1917
    %1937 = vmatpush.bf16.msra.mxu0 %v1916
    %1938 = vmatpush.bf16.msra.mxu0 %v1915
    %1939 = vmatmul.bf16.gmra.mxu0 %v1862
    %v1940 = vpop.f32.mrf.mxu0
    %v1941 = vadd.f32 %v1881, %v1940
    %v1942 = vpop.f32.mrf.mxu0
    %1943 = vdwg.mxu0
    %v1944 = vmax.f32 %v1941, 0.0
    %v1945 = vpack.c.bf16 %v1944, %v1944
    %v1946 = vld [vmem:[%s9] sm:$0xf]
    %v1947 = vld [vmem:[%s9 + $0x4] sm:$0xf]
    %v1948 = vld [vmem:[%s9 + $0x8] sm:$0xf]
    %v1949 = vld [vmem:[%s9 + $0xc] sm:$0xf]
    %v1950 = vld [vmem:[%s9 + $0x10] sm:$0xf]
    %v1951 = vld [vmem:[%s9 + $0x14] sm:$0xf]
    %v1952 = vld [vmem:[%s9 + $0x18] sm:$0xf]
    %v1953 = vld [vmem:[%s9 + $0x1c] sm:$0xf]
    %v1954 = vld [vmem:[%s9 + $0x20] sm:$0xf]
    %v1955 = vld [vmem:[%s9 + $0x24] sm:$0xf]
    %v1956 = vld [vmem:[%s9 + $0x28] sm:$0xf]
    %v1957 = vld [vmem:[%s9 + $0x2c] sm:$0xf]
    %v1958 = vld [vmem:[%s9 + $0x30] sm:$0xf]
    %v1959 = vld [vmem:[%s9 + $0x34] sm:$0xf]
    %v1960 = vld [vmem:[%s9 + $0x38] sm:$0xf]
    %v1961 = vld [vmem:[%s9 + $0x3c] sm:$0xf]
    %v1962 = vld [vmem:[%s10] sm:$0x1]
    %v1964 = vperm.slane %v1962, 0
    %v1982 = vunpack.c.l.b16 %v1946
    %v1983 = vunpack.c.l.b16 %v1947
    %v1984 = vunpack.c.l.b16 %v1948
    %v1985 = vunpack.c.l.b16 %v1949
    %v1986 = vunpack.c.l.b16 %v1950
    %v1987 = vunpack.c.l.b16 %v1951
    %v1988 = vunpack.c.l.b16 %v1952
    %v1989 = vunpack.c.l.b16 %v1953
    %v1990 = vunpack.c.l.b16 %v1954
    %v1991 = vunpack.c.l.b16 %v1955
    %v1992 = vunpack.c.l.b16 %v1956
    %v1993 = vunpack.c.l.b16 %v1957
    %v1994 = vunpack.c.l.b16 %v1958
    %v1995 = vunpack.c.l.b16 %v1959
    %v1996 = vunpack.c.l.b16 %v1960
    %v1997 = vunpack.c.l.b16 %v1961
    %v1998 = vpack.c.b16 %v1983, %v1982
    %v1999 = vpack.c.b16 %v1985, %v1984
    %v2000 = vpack.c.b16 %v1987, %v1986
    %v2001 = vpack.c.b16 %v1989, %v1988
    %v2002 = vpack.c.b16 %v1991, %v1990
    %v2003 = vpack.c.b16 %v1993, %v1992
    %v2004 = vpack.c.b16 %v1995, %v1994
    %v2005 = vpack.c.b16 %v1997, %v1996
    %2014 = vmatpush.bf16.msra.mxu0 %v2005
    %2015 = vmatpush.bf16.msra.mxu0 %v2004
    %2016 = vmatpush.bf16.msra.mxu0 %v2003
    %2017 = vmatpush.bf16.msra.mxu0 %v2002
    %2018 = vmatpush.bf16.msra.mxu0 %v2001
    %2019 = vmatpush.bf16.msra.mxu0 %v2000
    %2020 = vmatpush.bf16.msra.mxu0 %v1999
    %2021 = vmatpush.bf16.msra.mxu0 %v1998
    %2022 = vmatmul.bf16.gmra.mxu0 %v1945
    %v2023 = vpop.f32.mrf.mxu0
    %v2024 = vadd.f32 %v1964, %v2023
    %v2025 = vpop.f32.mrf.mxu0
    %2026 = vdwg.mxu0
    %2027 = vst [vmem:[%s11] sm:$0xff] %v2024
    // Predicated region
    $region54: #{forward.1} parent=1 // pred_check
      _
    $region55: #{forward.1} parent=1 // pred_check_branch
      %2029 = sbr.rel (0) target = $region57
    $region56: #{forward.1} parent=1 // pred_region
      _
    $region57: #{forward.1} parent=1 // pred_fallthru
      _
    // Predicated region
    $region58: #{forward.1} parent=1 // pred_check
      _
    $region59: #{forward.1} parent=1 // pred_check_branch
      %2031 = sbr.rel (0) target = $region61
    $region60: #{forward.1} parent=1 // pred_region
      _
    $region61: #{forward.1} parent=1 // pred_fallthru
      _
    %2032 = vsyncpa [#allocation3], 1
    %2033 = vsyncpa [#allocation5], 1

</llo_original>
